<compile_context>
chip_gen: v5e
topology: v5e:2x2
jax: 0.10.0
libtpu: 0.0.40
codegen_flags: <defaults>
</compile_context>

<pallas_src>
import jax
import jax.numpy as jnp
from jax.experimental import pallas as pl
from jax.experimental.pallas import tpu as pltpu

EPS = 1e-5                       # BatchNorm2d default eps
_ROW_TARGET = 512                # target M rows per weight-resident matmul
_VMEM_LIMIT = 48 * 1024 * 1024   # leave headroom on v7x (64 MiB/TC)


# ---------------------------------------------------------------------------
# Pass 1: conv1 (3x3, pad=1 via H-halo + truncated band eyes) + bn1 partial stats
# ---------------------------------------------------------------------------
def _conv1_stats_kernel(xp_ref, bd1_ref, y1_ref, st_ref):
    # xp_ref:  (Nb, H+2, W*C)  f32  H-padded images (lane-dense)
    # bd1_ref: (3, W*C, W*C)   bf16 banded conv1 weights (one per dy, truncated eyes)
    # y1_ref:  (Nb*H, W*C)     bf16 conv1 output rows (bias b1 dropped: cancelled by bn1)
    # st_ref:  (1, 2, W*C)     f32  per-block [sum; sum of squares]
    nb, hp, wc = xp_ref.shape
    h = hp - 2
    m = nb * h
    acc = None
    for dy in range(3):                                   # unrolled: 3 MXU matmuls
        # f32 slice then collapse (Nb, H, WC) -> (Nb*H, WC): layout-trivial for H % 8 == 0
        xs = xp_ref[:, dy:dy + h, :].reshape(m, wc)
        p = jnp.dot(xs.astype(jnp.bfloat16), bd1_ref[dy],
                    preferred_element_type=jnp.float32)
        acc = p if acc is None else acc + p
    y1_ref[...] = acc.astype(y1_ref.dtype)
    st_ref[0] = jnp.concatenate(                          # one (2, WC) store
        [jnp.sum(acc, axis=0, keepdims=True),
         jnp.sum(acc * acc, axis=0, keepdims=True)], axis=0)


# ---------------------------------------------------------------------------
# Pass 2: bn1 + relu + conv2 reduced directly to bn2 partial stats (y2 never hits HBM)
# ---------------------------------------------------------------------------
def _bn1_relu_conv2_stats_kernel(y1_ref, a1_ref, c1_ref, bd2_ref, st_ref):
    z = jnp.maximum(y1_ref[...].astype(jnp.float32) * a1_ref[...] + c1_ref[...], 0.0)
    y2 = jnp.dot(z.astype(jnp.bfloat16), bd2_ref[...],
                 preferred_element_type=jnp.float32)       # b2 dropped (cancelled by bn2)
    st_ref[0] = jnp.concatenate(
        [jnp.sum(y2, axis=0, keepdims=True),
         jnp.sum(y2 * y2, axis=0, keepdims=True)], axis=0)


# ---------------------------------------------------------------------------
# Pass 3: bn1 + relu recomputed, then fused (conv2 -> bn2 -> conv3) as ONE matmul + bias
# ---------------------------------------------------------------------------
def _bn1_relu_fused_out_kernel(y1_ref, a1_ref, c1_ref, w23_ref, bias_ref, o_ref):
    z = jnp.maximum(y1_ref[...].astype(jnp.float32) * a1_ref[...] + c1_ref[...], 0.0)
    o = jnp.dot(z.astype(jnp.bfloat16), w23_ref[...],
                preferred_element_type=jnp.float32)
    o_ref[...] = (o + bias_ref[...]).astype(o_ref.dtype)


# ---------------------------------------------------------------------------
# Wrapper helpers (tiny host-side/JAX glue)
# ---------------------------------------------------------------------------
def _conv1_banded(w1, W, C):
    """(9C, C) conv1 weight -> (3, W*C, W*C) banded matrices, one per dy.

    Boundary-truncated eyes: zero padding makes out-of-range dx taps contribute 0,
    so the truncated eye is exact and K stays W*C (no W padding)."""
    w1r = w1.reshape(3, 3, C, C)  # (dy, dx, cin, cout)
    mats = []
    for dy in range(3):
        m = jnp.zeros((W * C, W * C), jnp.float32)
        for dx in range(3):
            # unpadded input column (w + dx - 1) feeds output column w
            m = m + jnp.kron(jnp.eye(W, W, k=1 - dx, dtype=jnp.float32), w1r[dy, dx])
        mats.append(m)
    return jnp.stack(mats)


def _bn_fold(st, count, W, C, gamma, beta):
    """Partial (sum, sumsq) blocks -> per-channel BN affine scale/shift (f32)."""
    tot = jnp.sum(st, axis=0).reshape(2, W, C).sum(axis=1)        # (2, C)
    mean = tot[0] / count
    var = tot[1] / count - mean * mean                            # biased variance
    scale = jax.lax.rsqrt(var + EPS) * gamma[0]
    shift = beta[0] - mean * scale
    return scale, shift


def _pick_image_block(n, h):
    """Largest divisor Nb of N with Nb*H <= _ROW_TARGET and a sublane-aligned row block."""
    cap = max(1, _ROW_TARGET // max(h, 1))
    nb = 1
    for d in range(1, n + 1):
        if n % d == 0 and d <= cap and (d == n or (d * h) % 8 == 0):
            nb = d
    return nb


def _pick_row_block(rows):
    """Largest divisor of `rows` <= _ROW_TARGET (multiple of 8 unless it is `rows`)."""
    if rows <= _ROW_TARGET:
        return rows
    best = 1
    for d in range(1, rows + 1):
        if rows % d == 0 and d <= _ROW_TARGET and d % 8 == 0:
            best = d
    return best if best > 1 else rows


@jax.jit
def local_attention(x_nchw, params):
    """Pallas implementation of LocalAttention.forward (returns `attn`)."""
    w1, b1, g1, be1, w2, b2, g2, be2, w3, b3 = params
    # A conv bias immediately followed by training-mode BatchNorm (batch statistics)
    # is exactly cancelled -> b1, b2 intentionally unused.
    del b1, b2

    x = jnp.transpose(x_nchw, (0, 2, 3, 1)).astype(jnp.float32)   # NCHW -> NHWC
    N, H, W, C = x.shape
    WC = W * C
    Hp = H + 2
    NH = N * H
    count = N * H * W

    # H-only zero pad (W boundaries handled by the truncated band eyes); lane-dense
    # flatten of (W, C).  Kept f32 so the in-kernel (Nb,H,.) -> (Nb*H,.) collapse is
    # layout-trivial; operands are cast to bf16 right before the MXU.
    xpf = jnp.pad(x, ((0, 0), (1, 1), (0, 0), (0, 0))).reshape(N, Hp, WC)

    bd1 = _conv1_banded(w1, W, C).astype(jnp.bfloat16)                       # (3, WC, WC)
    bd2 = jnp.kron(jnp.eye(W, dtype=jnp.float32), w2).astype(jnp.bfloat16)   # (WC, WC)

    cp = pltpu.CompilerParams(dimension_semantics=("parallel",),
                              vmem_limit_bytes=_VMEM_LIMIT)

    # ---- pass 1: conv1 + bn1 partial stats --------------------------------
    nb = _pick_image_block(N, H)
    g1n = N // nb
    y1, st1 = pl.pallas_call(
        _conv1_stats_kernel,
        out_shape=(jax.ShapeDtypeStruct((NH, WC), jnp.bfloat16),
                   jax.ShapeDtypeStruct((g1n, 2, WC), jnp.float32)),
        grid=(g1n,),
        in_specs=[pl.BlockSpec((nb, Hp, WC), lambda n: (n, 0, 0)),
                  pl.BlockSpec((3, WC, WC), lambda n: (0, 0, 0))],     # resident weights
        out_specs=(pl.BlockSpec((nb * H, WC), lambda n: (n, 0)),
                   pl.BlockSpec((1, 2, WC), lambda n: (n, 0, 0))),
        compiler_params=cp,
    )(xpf, bd1)

    s1, h1 = _bn_fold(st1, count, W, C, g1, be1)
    a1t = jnp.tile(s1.reshape(1, C), (1, W))                         # (1, WC) f32
    c1t = jnp.tile(h1.reshape(1, C), (1, W))

    # ---- pass 2: bn1 + relu + conv2 -> bn2 partial stats only --------------
    tm = _pick_row_block(NH)
    g2n = NH // tm
    st2 = pl.pallas_call(
        _bn1_relu_conv2_stats_kernel,
        out_shape=jax.ShapeDtypeStruct((g2n, 2, WC), jnp.float32),
        grid=(g2n,),
        in_specs=[pl.BlockSpec((tm, WC), lambda n: (n, 0)),
                  pl.BlockSpec((1, WC), lambda n: (0, 0)),
                  pl.BlockSpec((1, WC), lambda n: (0, 0)),
                  pl.BlockSpec((WC, WC), lambda n: (0, 0))],          # resident weight
        out_specs=pl.BlockSpec((1, 2, WC), lambda n: (n, 0, 0)),
        compiler_params=cp,
    )(y1, a1t, c1t, bd2)

    s2, h2 = _bn_fold(st2, count, W, C, g2, be2)
    w23 = w2 @ (s2[:, None] * w3)                   # conv2 . diag(bn2 scale) . conv3 (C,C)
    bias23 = h2.reshape(1, C) @ w3 + b3             # bn2 shift through conv3, plus b3
    bd23 = jnp.kron(jnp.eye(W, dtype=jnp.float32), w23).astype(jnp.bfloat16)  # (WC, WC)
    bt = jnp.tile(bias23, (1, W)).astype(jnp.float32)                         # (1, WC)

    # ---- pass 3: bn1 + relu + fused conv2/bn2/conv3 (single matmul) --------
    out = pl.pallas_call(
        _bn1_relu_fused_out_kernel,
        out_shape=jax.ShapeDtypeStruct((NH, WC), jnp.float32),
        grid=(g2n,),
        in_specs=[pl.BlockSpec((tm, WC), lambda n: (n, 0)),
                  pl.BlockSpec((1, WC), lambda n: (0, 0)),
                  pl.BlockSpec((1, WC), lambda n: (0, 0)),
                  pl.BlockSpec((WC, WC), lambda n: (0, 0)),           # resident weight
                  pl.BlockSpec((1, WC), lambda n: (0, 0))],
        out_specs=pl.BlockSpec((tm, WC), lambda n: (n, 0)),
        compiler_params=cp,
    )(y1, a1t, c1t, bd23, bt)

    return jnp.transpose(out.reshape(N, H, W, C), (0, 3, 1, 2))       # back to NCHW


# ---------------------------------------------------------------------------
# Pure-JAX reference (same math, f32 HIGHEST precision) for validation
# ---------------------------------------------------------------------------
def reference(x_nchw, params):
    w1, b1, g1, be1, w2, b2, g2, be2, w3, b3 = params
    x = jnp.transpose(x_nchw, (0, 2, 3, 1))
    C = x.shape[-1]
    hp = jax.lax.Precision.HIGHEST

    def bn(y, g, be):
        m = jnp.mean(y, axis=(0, 1, 2), keepdims=True)
        v = jnp.mean((y - m) ** 2, axis=(0, 1, 2), keepdims=True)
        return (y - m) * jax.lax.rsqrt(v + EPS) * g + be

    y = jax.lax.conv_general_dilated(
        x, w1.reshape(3, 3, C, C), (1, 1), ((1, 1), (1, 1)),
        dimension_numbers=("NHWC", "HWIO", "NHWC"), precision=hp) + b1
    y = jax.nn.relu(bn(y, g1, be1))
    y = jnp.einsum("nhwc,cd->nhwd", y, w2, precision=hp) + b2
    y = bn(y, g2, be2)
    y = jnp.einsum("nhwc,cd->nhwd", y, w3, precision=hp) + b3
    return jnp.transpose(y, (0, 3, 1, 2))


def make_params(key, C):
    ks = jax.random.split(key, 10)
    w1 = 0.05 * jax.random.normal(ks[0], (9 * C, C), jnp.float32)
    b1 = 0.05 * jax.random.normal(ks[1], (1, C), jnp.float32)
    g1 = 1.0 + 0.1 * jax.random.normal(ks[2], (1, C), jnp.float32)
    be1 = 0.1 * jax.random.normal(ks[3], (1, C), jnp.float32)
    w2 = 0.1 * jax.random.normal(ks[4], (C, C), jnp.float32)
    b2 = 0.05 * jax.random.normal(ks[5], (1, C), jnp.float32)
    g2 = 1.0 + 0.1 * jax.random.normal(ks[6], (1, C), jnp.float32)
    be2 = 0.1 * jax.random.normal(ks[7], (1, C), jnp.float32)
    w3 = 0.1 * jax.random.normal(ks[8], (C, C), jnp.float32)
    b3 = 0.05 * jax.random.normal(ks[9], (1, C), jnp.float32)
    return (w1, b1, g1, be1, w2, b2, g2, be2, w3, b3)


if __name__ == "__main__":
    key = jax.random.PRNGKey(0)
    kx, kp = jax.random.split(key)
    N, C, H, W = 2, 32, 8, 8                      # x is NCHW, like the PyTorch module
    x = jax.random.normal(kx, (N, C, H, W), jnp.float32)
    params = make_params(kp, C)

    out = local_attention(x, params)
    out = jax.block_until_ready(out)

    ref = reference(x, params)
    assert out.shape == (N, C, H, W)
    # bf16 MXU operands (f32 accumulation / f32 BN stats) vs f32-HIGHEST reference.
    err = float(jnp.max(jnp.abs(out - ref)))
    assert jnp.allclose(out, ref, atol=2e-2, rtol=2e-2), err
    print("KERNEL_OK")
</pallas_src>

<mosaic_0001>
module attributes {stable_mosaic.version = 11 : i64} {
  func.func @_conv1_stats_kernel(%arg0: i32, %arg1: memref<2x10x256xf32, #tpu.memory_space<vmem>>, %arg2: memref<3x256x256xbf16, #tpu.memory_space<vmem>>, %arg3: memref<16x256xbf16, #tpu.memory_space<vmem>>, %arg4: memref<1x2x256xf32, #tpu.memory_space<vmem>>) attributes {dimension_semantics = [#tpu.dimension_semantics<parallel>], iteration_bounds = array<i64: 1>, scalar_prefetch = 0 : i64, scratch_operands = 0 : i64, tpu.core_type = #tpu.core_type<tc>, window_params = [{transform_indices = @transform_0, window_bounds = array<i64: 2, 10, 256>}, {pipeline_mode = #tpu.pipeline_mode<synchronous>, transform_indices = @transform_1, window_bounds = array<i64: 3, 256, 256>}, {transform_indices = @transform_2, window_bounds = array<i64: 16, 256>}, {transform_indices = @transform_3, window_bounds = array<i64: 1, 2, 256>}]} {
    %c0 = arith.constant 0 : index
    %c0_0 = arith.constant 0 : index
    %c0_1 = arith.constant 0 : index
    %0 = vector.load %arg1[%c0, %c0_0, %c0_1] : memref<2x10x256xf32, #tpu.memory_space<vmem>>, vector<2x8x256xf32>
    %1 = vector.shape_cast %0 : vector<2x8x256xf32> to vector<16x256xf32>
    %2 = arith.truncf %1 : vector<16x256xf32> to vector<16x256xbf16>
    %c0_2 = arith.constant 0 : index
    %c0_3 = arith.constant 0 : index
    %c0_4 = arith.constant 0 : index
    %3 = vector.load %arg2[%c0_2, %c0_3, %c0_4] : memref<3x256x256xbf16, #tpu.memory_space<vmem>>, vector<1x256x256xbf16>
    %4 = vector.shape_cast %3 : vector<1x256x256xbf16> to vector<256x256xbf16>
    %cst = arith.constant dense<0.000000e+00> : vector<16x256xf32>
    %5 = tpu.matmul %2, %4, %cst {dimension_numbers = #tpu.dot_dimension_numbers<[1], [0], [0], [1], [0, 0, 1, 1], [], []>} : vector<16x256xbf16>, vector<256x256xbf16>, vector<16x256xf32> -> vector<16x256xf32>
    %c0_5 = arith.constant 0 : index
    %c1 = arith.constant 1 : index
    %c0_6 = arith.constant 0 : index
    %6 = vector.load %arg1[%c0_5, %c1, %c0_6] : memref<2x10x256xf32, #tpu.memory_space<vmem>>, vector<2x8x256xf32>
    %7 = vector.shape_cast %6 : vector<2x8x256xf32> to vector<16x256xf32>
    %8 = arith.truncf %7 : vector<16x256xf32> to vector<16x256xbf16>
    %c1_7 = arith.constant 1 : index
    %c0_8 = arith.constant 0 : index
    %c0_9 = arith.constant 0 : index
    %9 = vector.load %arg2[%c1_7, %c0_8, %c0_9] : memref<3x256x256xbf16, #tpu.memory_space<vmem>>, vector<1x256x256xbf16>
    %10 = vector.shape_cast %9 : vector<1x256x256xbf16> to vector<256x256xbf16>
    %cst_10 = arith.constant dense<0.000000e+00> : vector<16x256xf32>
    %11 = tpu.matmul %8, %10, %cst_10 {dimension_numbers = #tpu.dot_dimension_numbers<[1], [0], [0], [1], [0, 0, 1, 1], [], []>} : vector<16x256xbf16>, vector<256x256xbf16>, vector<16x256xf32> -> vector<16x256xf32>
    %12 = arith.addf %5, %11 : vector<16x256xf32>
    %c0_11 = arith.constant 0 : index
    %c2 = arith.constant 2 : index
    %c0_12 = arith.constant 0 : index
    %13 = vector.load %arg1[%c0_11, %c2, %c0_12] : memref<2x10x256xf32, #tpu.memory_space<vmem>>, vector<2x8x256xf32>
    %14 = vector.shape_cast %13 : vector<2x8x256xf32> to vector<16x256xf32>
    %15 = arith.truncf %14 : vector<16x256xf32> to vector<16x256xbf16>
    %c2_13 = arith.constant 2 : index
    %c0_14 = arith.constant 0 : index
    %c0_15 = arith.constant 0 : index
    %16 = vector.load %arg2[%c2_13, %c0_14, %c0_15] : memref<3x256x256xbf16, #tpu.memory_space<vmem>>, vector<1x256x256xbf16>
    %17 = vector.shape_cast %16 : vector<1x256x256xbf16> to vector<256x256xbf16>
    %cst_16 = arith.constant dense<0.000000e+00> : vector<16x256xf32>
    %18 = tpu.matmul %15, %17, %cst_16 {dimension_numbers = #tpu.dot_dimension_numbers<[1], [0], [0], [1], [0, 0, 1, 1], [], []>} : vector<16x256xbf16>, vector<256x256xbf16>, vector<16x256xf32> -> vector<16x256xf32>
    %19 = arith.addf %12, %18 : vector<16x256xf32>
    %20 = arith.truncf %19 : vector<16x256xf32> to vector<16x256xbf16>
    %c0_17 = arith.constant 0 : index
    %c0_18 = arith.constant 0 : index
    %21 = vector.load %arg3[%c0_17, %c0_18] : memref<16x256xbf16, #tpu.memory_space<vmem>>, vector<16x256xbf16>
    tpu.vector_store %arg3[%c0_17, %c0_18], %20 {strides = array<i32>} : memref<16x256xbf16, #tpu.memory_space<vmem>>, vector<16x256xbf16>,
    %cst_19 = arith.constant dense<0.000000e+00> : vector<256xf32>
    %22 = vector.multi_reduction <add>, %19, %cst_19 [0] : vector<16x256xf32> to vector<256xf32>
    %23 = vector.shape_cast %22 : vector<256xf32> to vector<1x256xf32>
    %24 = arith.mulf %19, %19 : vector<16x256xf32>
    %cst_20 = arith.constant dense<0.000000e+00> : vector<256xf32>
    %25 = vector.multi_reduction <add>, %24, %cst_20 [0] : vector<16x256xf32> to vector<256xf32>
    %26 = vector.shape_cast %25 : vector<256xf32> to vector<1x256xf32>
    %27 = tpu.concatenate %23, %26 in 0 : vector<1x256xf32>, vector<1x256xf32> -> vector<2x256xf32>
    %c0_21 = arith.constant 0 : index
    %c0_22 = arith.constant 0 : index
    %c0_23 = arith.constant 0 : index
    %28 = vector.load %arg4[%c0_21, %c0_22, %c0_23] : memref<1x2x256xf32, #tpu.memory_space<vmem>>, vector<1x2x256xf32>
    %29 = vector.shape_cast %28 : vector<1x2x256xf32> to vector<2x256xf32>
    %30 = vector.shape_cast %27 : vector<2x256xf32> to vector<1x2x256xf32>
    tpu.vector_store %arg4[%c0_21, %c0_22, %c0_23], %30 {strides = array<i32>} : memref<1x2x256xf32, #tpu.memory_space<vmem>>, vector<1x2x256xf32>,
    return
  }
  func.func @transform_0(%arg0: i32) -> (i32, i32, i32) {
    %c0_i32 = arith.constant 0 : i32
    %c0_i32_0 = arith.constant 0 : i32
    %c0_i32_1 = arith.constant 0 : i32
    return %arg0, %c0_i32, %c0_i32_0 : i32, i32, i32
  }
  func.func @transform_1(%arg0: i32) -> (i32, i32, i32) {
    %c0_i32 = arith.constant 0 : i32
    %c0_i32_0 = arith.constant 0 : i32
    %c0_i32_1 = arith.constant 0 : i32
    %c0_i32_2 = arith.constant 0 : i32
    return %c0_i32, %c0_i32_0, %c0_i32_1 : i32, i32, i32
  }
  func.func @transform_2(%arg0: i32) -> (i32, i32) {
    %c0_i32 = arith.constant 0 : i32
    %c0_i32_0 = arith.constant 0 : i32
    return %arg0, %c0_i32 : i32, i32
  }
  func.func @transform_3(%arg0: i32) -> (i32, i32, i32) {
    %c0_i32 = arith.constant 0 : i32
    %c0_i32_0 = arith.constant 0 : i32
    %c0_i32_1 = arith.constant 0 : i32
    return %arg0, %c0_i32, %c0_i32_0 : i32, i32, i32
  }
}

module attributes {stable_mosaic.version = 11 : i64} {
  func.func @_bn1_relu_conv2_stats_kernel(%arg0: i32, %arg1: memref<16x256xbf16, #tpu.memory_space<vmem>>, %arg2: memref<1x256xf32, #tpu.memory_space<vmem>>, %arg3: memref<1x256xf32, #tpu.memory_space<vmem>>, %arg4: memref<256x256xbf16, #tpu.memory_space<vmem>>, %arg5: memref<1x2x256xf32, #tpu.memory_space<vmem>>) attributes {dimension_semantics = [#tpu.dimension_semantics<parallel>], iteration_bounds = array<i64: 1>, scalar_prefetch = 0 : i64, scratch_operands = 0 : i64, tpu.core_type = #tpu.core_type<tc>, window_params = [{transform_indices = @transform_0, window_bounds = array<i64: 16, 256>}, {pipeline_mode = #tpu.pipeline_mode<synchronous>, transform_indices = @transform_1, window_bounds = array<i64: 1, 256>}, {pipeline_mode = #tpu.pipeline_mode<synchronous>, transform_indices = @transform_2, window_bounds = array<i64: 1, 256>}, {pipeline_mode = #tpu.pipeline_mode<synchronous>, transform_indices = @transform_3, window_bounds = array<i64: 256, 256>}, {transform_indices = @transform_4, window_bounds = array<i64: 1, 2, 256>}]} {
    %c0 = arith.constant 0 : index
    %c0_0 = arith.constant 0 : index
    %0 = vector.load %arg1[%c0, %c0_0] : memref<16x256xbf16, #tpu.memory_space<vmem>>, vector<16x256xbf16>
    %1 = arith.extf %0 : vector<16x256xbf16> to vector<16x256xf32>
    %c0_1 = arith.constant 0 : index
    %c0_2 = arith.constant 0 : index
    %2 = vector.load %arg2[%c0_1, %c0_2] : memref<1x256xf32, #tpu.memory_space<vmem>>, vector<1x256xf32>
    %3 = vector.broadcast %2 : vector<1x256xf32> to vector<16x256xf32>
    %4 = arith.mulf %1, %3 : vector<16x256xf32>
    %c0_3 = arith.constant 0 : index
    %c0_4 = arith.constant 0 : index
    %5 = vector.load %arg3[%c0_3, %c0_4] : memref<1x256xf32, #tpu.memory_space<vmem>>, vector<1x256xf32>
    %6 = vector.broadcast %5 : vector<1x256xf32> to vector<16x256xf32>
    %7 = arith.addf %4, %6 : vector<16x256xf32>
    %cst = arith.constant 0.000000e+00 : f32
    %8 = vector.broadcast %cst : f32 to vector<16x256xf32>
    %9 = arith.maximumf %7, %8 : vector<16x256xf32>
    %10 = arith.truncf %9 : vector<16x256xf32> to vector<16x256xbf16>
    %c0_5 = arith.constant 0 : index
    %c0_6 = arith.constant 0 : index
    %11 = vector.load %arg4[%c0_5, %c0_6] : memref<256x256xbf16, #tpu.memory_space<vmem>>, vector<256x256xbf16>
    %cst_7 = arith.constant dense<0.000000e+00> : vector<16x256xf32>
    %12 = tpu.matmul %10, %11, %cst_7 {dimension_numbers = #tpu.dot_dimension_numbers<[1], [0], [0], [1], [0, 0, 1, 1], [], []>} : vector<16x256xbf16>, vector<256x256xbf16>, vector<16x256xf32> -> vector<16x256xf32>
    %cst_8 = arith.constant dense<0.000000e+00> : vector<256xf32>
    %13 = vector.multi_reduction <add>, %12, %cst_8 [0] : vector<16x256xf32> to vector<256xf32>
    %14 = vector.shape_cast %13 : vector<256xf32> to vector<1x256xf32>
    %15 = arith.mulf %12, %12 : vector<16x256xf32>
    %cst_9 = arith.constant dense<0.000000e+00> : vector<256xf32>
    %16 = vector.multi_reduction <add>, %15, %cst_9 [0] : vector<16x256xf32> to vector<256xf32>
    %17 = vector.shape_cast %16 : vector<256xf32> to vector<1x256xf32>
    %18 = tpu.concatenate %14, %17 in 0 : vector<1x256xf32>, vector<1x256xf32> -> vector<2x256xf32>
    %c0_10 = arith.constant 0 : index
    %c0_11 = arith.constant 0 : index
    %c0_12 = arith.constant 0 : index
    %19 = vector.load %arg5[%c0_10, %c0_11, %c0_12] : memref<1x2x256xf32, #tpu.memory_space<vmem>>, vector<1x2x256xf32>
    %20 = vector.shape_cast %19 : vector<1x2x256xf32> to vector<2x256xf32>
    %21 = vector.shape_cast %18 : vector<2x256xf32> to vector<1x2x256xf32>
    tpu.vector_store %arg5[%c0_10, %c0_11, %c0_12], %21 {strides = array<i32>} : memref<1x2x256xf32, #tpu.memory_space<vmem>>, vector<1x2x256xf32>,
    return
  }
  func.func @transform_0(%arg0: i32) -> (i32, i32) {
    %c0_i32 = arith.constant 0 : i32
    %c0_i32_0 = arith.constant 0 : i32
    return %arg0, %c0_i32 : i32, i32
  }
  func.func @transform_1(%arg0: i32) -> (i32, i32) {
    %c0_i32 = arith.constant 0 : i32
    %c0_i32_0 = arith.constant 0 : i32
    %c0_i32_1 = arith.constant 0 : i32
    return %c0_i32, %c0_i32_0 : i32, i32
  }
  func.func @transform_2(%arg0: i32) -> (i32, i32) {
    %c0_i32 = arith.constant 0 : i32
    %c0_i32_0 = arith.constant 0 : i32
    %c0_i32_1 = arith.constant 0 : i32
    return %c0_i32, %c0_i32_0 : i32, i32
  }
  func.func @transform_3(%arg0: i32) -> (i32, i32) {
    %c0_i32 = arith.constant 0 : i32
    %c0_i32_0 = arith.constant 0 : i32
    %c0_i32_1 = arith.constant 0 : i32
    return %c0_i32, %c0_i32_0 : i32, i32
  }
  func.func @transform_4(%arg0: i32) -> (i32, i32, i32) {
    %c0_i32 = arith.constant 0 : i32
    %c0_i32_0 = arith.constant 0 : i32
    %c0_i32_1 = arith.constant 0 : i32
    return %arg0, %c0_i32, %c0_i32_0 : i32, i32, i32
  }
}

module attributes {stable_mosaic.version = 11 : i64} {
  func.func @_bn1_relu_fused_out_kernel(%arg0: i32, %arg1: memref<16x256xbf16, #tpu.memory_space<vmem>>, %arg2: memref<1x256xf32, #tpu.memory_space<vmem>>, %arg3: memref<1x256xf32, #tpu.memory_space<vmem>>, %arg4: memref<256x256xbf16, #tpu.memory_space<vmem>>, %arg5: memref<1x256xf32, #tpu.memory_space<vmem>>, %arg6: memref<16x256xf32, #tpu.memory_space<vmem>>) attributes {dimension_semantics = [#tpu.dimension_semantics<parallel>], iteration_bounds = array<i64: 1>, scalar_prefetch = 0 : i64, scratch_operands = 0 : i64, tpu.core_type = #tpu.core_type<tc>, window_params = [{transform_indices = @transform_0, window_bounds = array<i64: 16, 256>}, {pipeline_mode = #tpu.pipeline_mode<synchronous>, transform_indices = @transform_1, window_bounds = array<i64: 1, 256>}, {pipeline_mode = #tpu.pipeline_mode<synchronous>, transform_indices = @transform_2, window_bounds = array<i64: 1, 256>}, {pipeline_mode = #tpu.pipeline_mode<synchronous>, transform_indices = @transform_3, window_bounds = array<i64: 256, 256>}, {pipeline_mode = #tpu.pipeline_mode<synchronous>, transform_indices = @transform_4, window_bounds = array<i64: 1, 256>}, {transform_indices = @transform_5, window_bounds = array<i64: 16, 256>}]} {
    %c0 = arith.constant 0 : index
    %c0_0 = arith.constant 0 : index
    %0 = vector.load %arg1[%c0, %c0_0] : memref<16x256xbf16, #tpu.memory_space<vmem>>, vector<16x256xbf16>
    %1 = arith.extf %0 : vector<16x256xbf16> to vector<16x256xf32>
    %c0_1 = arith.constant 0 : index
    %c0_2 = arith.constant 0 : index
    %2 = vector.load %arg2[%c0_1, %c0_2] : memref<1x256xf32, #tpu.memory_space<vmem>>, vector<1x256xf32>
    %3 = vector.broadcast %2 : vector<1x256xf32> to vector<16x256xf32>
    %4 = arith.mulf %1, %3 : vector<16x256xf32>
    %c0_3 = arith.constant 0 : index
    %c0_4 = arith.constant 0 : index
    %5 = vector.load %arg3[%c0_3, %c0_4] : memref<1x256xf32, #tpu.memory_space<vmem>>, vector<1x256xf32>
    %6 = vector.broadcast %5 : vector<1x256xf32> to vector<16x256xf32>
    %7 = arith.addf %4, %6 : vector<16x256xf32>
    %cst = arith.constant 0.000000e+00 : f32
    %8 = vector.broadcast %cst : f32 to vector<16x256xf32>
    %9 = arith.maximumf %7, %8 : vector<16x256xf32>
    %10 = arith.truncf %9 : vector<16x256xf32> to vector<16x256xbf16>
    %c0_5 = arith.constant 0 : index
    %c0_6 = arith.constant 0 : index
    %11 = vector.load %arg4[%c0_5, %c0_6] : memref<256x256xbf16, #tpu.memory_space<vmem>>, vector<256x256xbf16>
    %cst_7 = arith.constant dense<0.000000e+00> : vector<16x256xf32>
    %12 = tpu.matmul %10, %11, %cst_7 {dimension_numbers = #tpu.dot_dimension_numbers<[1], [0], [0], [1], [0, 0, 1, 1], [], []>} : vector<16x256xbf16>, vector<256x256xbf16>, vector<16x256xf32> -> vector<16x256xf32>
    %c0_8 = arith.constant 0 : index
    %c0_9 = arith.constant 0 : index
    %13 = vector.load %arg5[%c0_8, %c0_9] : memref<1x256xf32, #tpu.memory_space<vmem>>, vector<1x256xf32>
    %14 = vector.broadcast %13 : vector<1x256xf32> to vector<16x256xf32>
    %15 = arith.addf %12, %14 : vector<16x256xf32>
    %c0_10 = arith.constant 0 : index
    %c0_11 = arith.constant 0 : index
    %16 = vector.load %arg6[%c0_10, %c0_11] : memref<16x256xf32, #tpu.memory_space<vmem>>, vector<16x256xf32>
    tpu.vector_store %arg6[%c0_10, %c0_11], %15 {strides = array<i32>} : memref<16x256xf32, #tpu.memory_space<vmem>>, vector<16x256xf32>,
    return
  }
  func.func @transform_0(%arg0: i32) -> (i32, i32) {
    %c0_i32 = arith.constant 0 : i32
    %c0_i32_0 = arith.constant 0 : i32
    return %arg0, %c0_i32 : i32, i32
  }
  func.func @transform_1(%arg0: i32) -> (i32, i32) {
    %c0_i32 = arith.constant 0 : i32
    %c0_i32_0 = arith.constant 0 : i32
    %c0_i32_1 = arith.constant 0 : i32
    return %c0_i32, %c0_i32_0 : i32, i32
  }
  func.func @transform_2(%arg0: i32) -> (i32, i32) {
    %c0_i32 = arith.constant 0 : i32
    %c0_i32_0 = arith.constant 0 : i32
    %c0_i32_1 = arith.constant 0 : i32
    return %c0_i32, %c0_i32_0 : i32, i32
  }
  func.func @transform_3(%arg0: i32) -> (i32, i32) {
    %c0_i32 = arith.constant 0 : i32
    %c0_i32_0 = arith.constant 0 : i32
    %c0_i32_1 = arith.constant 0 : i32
    return %c0_i32, %c0_i32_0 : i32, i32
  }
  func.func @transform_4(%arg0: i32) -> (i32, i32) {
    %c0_i32 = arith.constant 0 : i32
    %c0_i32_0 = arith.constant 0 : i32
    %c0_i32_1 = arith.constant 0 : i32
    return %c0_i32, %c0_i32_0 : i32, i32
  }
  func.func @transform_5(%arg0: i32) -> (i32, i32) {
    %c0_i32 = arith.constant 0 : i32
    %c0_i32_0 = arith.constant 0 : i32
    return %arg0, %c0_i32 : i32, i32
  }
}

</mosaic_0001>

<llo_original>
// kernel: local_attention.3
$region0: #{local_attention.3}
  #allocation0 [shape = 'u32[]', space=smem, size = 0x4, offset = 0x4, fixed_abs, tag = 'smem constant byte address 0x4 - core index']
  #allocation1 [shape = 'u32[72,128]{1,0:T(1,128)}', space=vmem, size = 0x9000, scoped, tag = 'internal scratch']
  %s0 = inlined_call_operand.vmem [shape: f32[2,10,256], index: 0, kind: input, shape index: {}]
  %s1 = inlined_call_operand.vmem [shape: bf16[3,256,256], index: 1, kind: input, shape index: {}]
  %s2 = inlined_call_operand.vmem [shape: bf16[16,256], index: 2, kind: output, shape index: {0}]
  %s3 = inlined_call_operand.vmem [shape: f32[1,2,256], index: 3, kind: output, shape index: {1}]
  %4 = xla_tuple %s2, %s3
  %s5 = sld [smem:[#allocation0]]
  $region26: #{local_attention.3} parent=0
    _
  %s7 = ssub.s32 1, %s5
  %s8 = scalar_select 0, %s7, %s5
  // Predicated region
  $region2: #{local_attention.3} parent=0 // pred_check
    _
  $region3: #{local_attention.3} parent=0 // pred_check_branch
    %10 = sbr.rel (0) target = $region5
  $region4: #{local_attention.3} parent=0 // pred_region
    _
  $region5: #{local_attention.3} parent=0 // pred_fallthru
    _
  // Predicated region
  $region6: #{local_attention.3} parent=0 // pred_check
    _
  $region7: #{local_attention.3} parent=0 // pred_check_branch
    %12 = sbr.rel (0) target = $region9
  $region8: #{local_attention.3} parent=0 // pred_region
    _
  $region9: #{local_attention.3} parent=0 // pred_fallthru
    _
  %v13 = vld [vmem:[%s0] sm:$0xff]
  %v14 = vld [vmem:[%s0 + $0x8] sm:$0xff]
  %v15 = vld [vmem:[%s0 + $0x20] sm:$0xff]
  %v16 = vld [vmem:[%s0 + $0x28] sm:$0xff]
  %v17 = vpack.c.bf16 %v15, %v13
  %v18 = vpack.c.bf16 %v16, %v14
  %v19 = vld [vmem:[%s1] sm:$0xff]
  %v20 = vld [vmem:[%s1 + $0x8] sm:$0xff]
  %v21 = vld [vmem:[%s1 + $0x10] sm:$0xff]
  %v22 = vld [vmem:[%s1 + $0x18] sm:$0xff]
  %v23 = vld [vmem:[%s1 + $0x20] sm:$0xff]
  %v24 = vld [vmem:[%s1 + $0x28] sm:$0xff]
  %v25 = vld [vmem:[%s1 + $0x30] sm:$0xff]
  %v26 = vld [vmem:[%s1 + $0x38] sm:$0xff]
  %v27 = vld [vmem:[%s1 + $0x40] sm:$0xff]
  %v28 = vld [vmem:[%s1 + $0x48] sm:$0xff]
  %v29 = vld [vmem:[%s1 + $0x50] sm:$0xff]
  %v30 = vld [vmem:[%s1 + $0x58] sm:$0xff]
  %v31 = vld [vmem:[%s1 + $0x60] sm:$0xff]
  %v32 = vld [vmem:[%s1 + $0x68] sm:$0xff]
  %v33 = vld [vmem:[%s1 + $0x70] sm:$0xff]
  %v34 = vld [vmem:[%s1 + $0x78] sm:$0xff]
  %v35 = vld [vmem:[%s1 + $0x80] sm:$0xff]
  %v36 = vld [vmem:[%s1 + $0x88] sm:$0xff]
  %v37 = vld [vmem:[%s1 + $0x90] sm:$0xff]
  %v38 = vld [vmem:[%s1 + $0x98] sm:$0xff]
  %v39 = vld [vmem:[%s1 + $0xa0] sm:$0xff]
  %v40 = vld [vmem:[%s1 + $0xa8] sm:$0xff]
  %v41 = vld [vmem:[%s1 + $0xb0] sm:$0xff]
  %v42 = vld [vmem:[%s1 + $0xb8] sm:$0xff]
  %v43 = vld [vmem:[%s1 + $0xc0] sm:$0xff]
  %v44 = vld [vmem:[%s1 + $0xc8] sm:$0xff]
  %v45 = vld [vmem:[%s1 + $0xd0] sm:$0xff]
  %v46 = vld [vmem:[%s1 + $0xd8] sm:$0xff]
  %v47 = vld [vmem:[%s1 + $0xe0] sm:$0xff]
  %v48 = vld [vmem:[%s1 + $0xe8] sm:$0xff]
  %v49 = vld [vmem:[%s1 + $0xf0] sm:$0xff]
  %v50 = vld [vmem:[%s1 + $0xf8] sm:$0xff]
  %v51 = vld [vmem:[%s0] sm:$0xfe]
  %v52 = vld [vmem:[%s0 + $0x8] sm:$0xfe]
  %v53 = vld [vmem:[%s0 + $0x10] sm:$0x1]
  %v54 = vld [vmem:[%s0 + $0x18] sm:$0x1]
  %v55 = vld [vmem:[%s0 + $0x20] sm:$0xfe]
  %v56 = vld [vmem:[%s0 + $0x28] sm:$0xfe]
  %v57 = vld [vmem:[%s0 + $0x30] sm:$0x1]
  %v58 = vld [vmem:[%s0 + $0x38] sm:$0x1]
  %vm67 = vcmask 1046528
  %v68 = vrot.slane %v51, 1
  %v69 = vrot.slane %v53, 1
  %v70 = vsel %vm67, %v68, %v69
  %v71 = vrot.slane %v52, 1
  %v72 = vrot.slane %v54, 1
  %v73 = vsel %vm67, %v71, %v72
  %v74 = vrot.slane %v55, 1
  %v75 = vrot.slane %v57, 1
  %v76 = vsel %vm67, %v74, %v75
  %v77 = vrot.slane %v56, 1
  %v78 = vrot.slane %v58, 1
  %v79 = vsel %vm67, %v77, %v78
  %v84 = vpack.c.bf16 %v76, %v70
  %v85 = vpack.c.bf16 %v79, %v73
  %s86 = scalar_lea.vmem %s1, 256
  %v87 = vld [vmem:[%s86] sm:$0xff]
  %v88 = vld [vmem:[%s86 + $0x8] sm:$0xff]
  %v89 = vld [vmem:[%s86 + $0x10] sm:$0xff]
  %v90 = vld [vmem:[%s86 + $0x18] sm:$0xff]
  %v91 = vld [vmem:[%s86 + $0x20] sm:$0xff]
  %v92 = vld [vmem:[%s86 + $0x28] sm:$0xff]
  %v93 = vld [vmem:[%s86 + $0x30] sm:$0xff]
  %v94 = vld [vmem:[%s86 + $0x38] sm:$0xff]
  %v95 = vld [vmem:[%s86 + $0x40] sm:$0xff]
  %v96 = vld [vmem:[%s86 + $0x48] sm:$0xff]
  %v97 = vld [vmem:[%s86 + $0x50] sm:$0xff]
  %v98 = vld [vmem:[%s86 + $0x58] sm:$0xff]
  %v99 = vld [vmem:[%s86 + $0x60] sm:$0xff]
  %v100 = vld [vmem:[%s86 + $0x68] sm:$0xff]
  %v101 = vld [vmem:[%s86 + $0x70] sm:$0xff]
  %v102 = vld [vmem:[%s86 + $0x78] sm:$0xff]
  %v103 = vld [vmem:[%s86 + $0x80] sm:$0xff]
  %v104 = vld [vmem:[%s86 + $0x88] sm:$0xff]
  %v105 = vld [vmem:[%s86 + $0x90] sm:$0xff]
  %v106 = vld [vmem:[%s86 + $0x98] sm:$0xff]
  %v107 = vld [vmem:[%s86 + $0xa0] sm:$0xff]
  %v108 = vld [vmem:[%s86 + $0xa8] sm:$0xff]
  %v109 = vld [vmem:[%s86 + $0xb0] sm:$0xff]
  %v110 = vld [vmem:[%s86 + $0xb8] sm:$0xff]
  %v111 = vld [vmem:[%s86 + $0xc0] sm:$0xff]
  %v112 = vld [vmem:[%s86 + $0xc8] sm:$0xff]
  %v113 = vld [vmem:[%s86 + $0xd0] sm:$0xff]
  %v114 = vld [vmem:[%s86 + $0xd8] sm:$0xff]
  %v115 = vld [vmem:[%s86 + $0xe0] sm:$0xff]
  %v116 = vld [vmem:[%s86 + $0xe8] sm:$0xff]
  %v117 = vld [vmem:[%s86 + $0xf0] sm:$0xff]
  %v118 = vld [vmem:[%s86 + $0xf8] sm:$0xff]
  %v151 = vunpack.c.l.b16 %v87
  %v152 = vunpack.c.h.b16 %v87
  %v153 = vunpack.c.l.b16 %v88
  %v154 = vunpack.c.h.b16 %v88
  %v155 = vunpack.c.l.b16 %v89
  %v156 = vunpack.c.h.b16 %v89
  %v157 = vunpack.c.l.b16 %v90
  %v158 = vunpack.c.h.b16 %v90
  %v159 = vunpack.c.l.b16 %v91
  %v160 = vunpack.c.h.b16 %v91
  %v161 = vunpack.c.l.b16 %v92
  %v162 = vunpack.c.h.b16 %v92
  %v163 = vunpack.c.l.b16 %v93
  %v164 = vunpack.c.h.b16 %v93
  %v165 = vunpack.c.l.b16 %v94
  %v166 = vunpack.c.h.b16 %v94
  %v167 = vunpack.c.l.b16 %v95
  %v168 = vunpack.c.h.b16 %v95
  %v169 = vunpack.c.l.b16 %v96
  %v170 = vunpack.c.h.b16 %v96
  %v171 = vunpack.c.l.b16 %v97
  %v172 = vunpack.c.h.b16 %v97
  %v173 = vunpack.c.l.b16 %v98
  %v174 = vunpack.c.h.b16 %v98
  %v175 = vunpack.c.l.b16 %v99
  %v176 = vunpack.c.h.b16 %v99
  %v177 = vunpack.c.l.b16 %v100
  %v178 = vunpack.c.h.b16 %v100
  %v179 = vunpack.c.l.b16 %v101
  %v180 = vunpack.c.h.b16 %v101
  %v181 = vunpack.c.l.b16 %v102
  %v182 = vunpack.c.h.b16 %v102
  %v183 = vunpack.c.l.b16 %v103
  %v184 = vunpack.c.h.b16 %v103
  %v185 = vunpack.c.l.b16 %v104
  %v186 = vunpack.c.h.b16 %v104
  %v187 = vunpack.c.l.b16 %v105
  %v188 = vunpack.c.h.b16 %v105
  %v189 = vunpack.c.l.b16 %v106
  %v190 = vunpack.c.h.b16 %v106
  %v191 = vunpack.c.l.b16 %v107
  %v192 = vunpack.c.h.b16 %v107
  %v193 = vunpack.c.l.b16 %v108
  %v194 = vunpack.c.h.b16 %v108
  %v195 = vunpack.c.l.b16 %v109
  %v196 = vunpack.c.h.b16 %v109
  %v197 = vunpack.c.l.b16 %v110
  %v198 = vunpack.c.h.b16 %v110
  %v199 = vunpack.c.l.b16 %v111
  %v200 = vunpack.c.h.b16 %v111
  %v201 = vunpack.c.l.b16 %v112
  %v202 = vunpack.c.h.b16 %v112
  %v203 = vunpack.c.l.b16 %v113
  %v204 = vunpack.c.h.b16 %v113
  %v205 = vunpack.c.l.b16 %v114
  %v206 = vunpack.c.h.b16 %v114
  %v207 = vunpack.c.l.b16 %v115
  %v208 = vunpack.c.h.b16 %v115
  %v209 = vunpack.c.l.b16 %v116
  %v210 = vunpack.c.h.b16 %v116
  %v211 = vunpack.c.l.b16 %v117
  %v212 = vunpack.c.h.b16 %v117
  %v213 = vunpack.c.l.b16 %v118
  %v214 = vunpack.c.h.b16 %v118
  %v215 = vpack.c.b16 %v153, %v151
  %v216 = vpack.c.b16 %v154, %v152
  %v217 = vpack.c.b16 %v157, %v155
  %v218 = vpack.c.b16 %v158, %v156
  %v219 = vpack.c.b16 %v161, %v159
  %v220 = vpack.c.b16 %v162, %v160
  %v221 = vpack.c.b16 %v165, %v163
  %v222 = vpack.c.b16 %v166, %v164
  %v223 = vpack.c.b16 %v169, %v167
  %v224 = vpack.c.b16 %v170, %v168
  %v225 = vpack.c.b16 %v173, %v171
  %v226 = vpack.c.b16 %v174, %v172
  %v227 = vpack.c.b16 %v177, %v175
  %v228 = vpack.c.b16 %v178, %v176
  %v229 = vpack.c.b16 %v181, %v179
  %v230 = vpack.c.b16 %v182, %v180
  %v231 = vpack.c.b16 %v185, %v183
  %v232 = vpack.c.b16 %v186, %v184
  %v233 = vpack.c.b16 %v189, %v187
  %v234 = vpack.c.b16 %v190, %v188
  %v235 = vpack.c.b16 %v193, %v191
  %v236 = vpack.c.b16 %v194, %v192
  %v237 = vpack.c.b16 %v197, %v195
  %v238 = vpack.c.b16 %v198, %v196
  %v239 = vpack.c.b16 %v201, %v199
  %v240 = vpack.c.b16 %v202, %v200
  %v241 = vpack.c.b16 %v205, %v203
  %v242 = vpack.c.b16 %v206, %v204
  %v243 = vpack.c.b16 %v209, %v207
  %v244 = vpack.c.b16 %v210, %v208
  %v245 = vpack.c.b16 %v213, %v211
  %v246 = vpack.c.b16 %v214, %v212
  %279 = vmatpush.bf16.msra.mxu0 %v229
  %280 = vmatpush.bf16.msra.mxu0 %v227
  %281 = vmatpush.bf16.msra.mxu0 %v225
  %282 = vmatpush.bf16.msra.mxu0 %v223
  %283 = vmatpush.bf16.msra.mxu0 %v221
  %284 = vmatpush.bf16.msra.mxu0 %v219
  %285 = vmatpush.bf16.msra.mxu0 %v217
  %286 = vmatpush.bf16.msra.mxu0 %v215
  %287 = vmatmul.bf16.gmra.mxu0 %v84
  %v288 = vpop.f32.mrf.mxu0
  %v289 = vadd.f32 0.0, %v288
  %v290 = vpop.f32.mrf.mxu0
  %v291 = vadd.f32 0.0, %v290
  %292 = vdwg.mxu0
  %293 = vmatpush.bf16.msra.mxu0 %v245
  %294 = vmatpush.bf16.msra.mxu0 %v243
  %295 = vmatpush.bf16.msra.mxu0 %v241
  %296 = vmatpush.bf16.msra.mxu0 %v239
  %297 = vmatpush.bf16.msra.mxu0 %v237
  %298 = vmatpush.bf16.msra.mxu0 %v235
  %299 = vmatpush.bf16.msra.mxu0 %v233
  %300 = vmatpush.bf16.msra.mxu0 %v231
  %301 = vmatmul.bf16.gmra.mxu0 %v85
  %v302 = vpop.f32.mrf.mxu0
  %v303 = vadd.f32 %v289, %v302
  %v304 = vpop.f32.mrf.mxu0
  %v305 = vadd.f32 %v291, %v304
  %306 = vdwg.mxu0
  %307 = vmatpush.bf16.msra.mxu0 %v230
  %308 = vmatpush.bf16.msra.mxu0 %v228
  %309 = vmatpush.bf16.msra.mxu0 %v226
  %310 = vmatpush.bf16.msra.mxu0 %v224
  %311 = vmatpush.bf16.msra.mxu0 %v222
  %312 = vmatpush.bf16.msra.mxu0 %v220
  %313 = vmatpush.bf16.msra.mxu0 %v218
  %314 = vmatpush.bf16.msra.mxu0 %v216
  %315 = vmatmul.bf16.gmra.mxu0 %v84
  %v316 = vpop.f32.mrf.mxu0
  %v317 = vadd.f32 0.0, %v316
  %v318 = vpop.f32.mrf.mxu0
  %v319 = vadd.f32 0.0, %v318
  %320 = vdwg.mxu0
  %321 = vmatpush.bf16.msra.mxu0 %v246
  %322 = vmatpush.bf16.msra.mxu0 %v244
  %323 = vmatpush.bf16.msra.mxu0 %v242
  %324 = vmatpush.bf16.msra.mxu0 %v240
  %325 = vmatpush.bf16.msra.mxu0 %v238
  %326 = vmatpush.bf16.msra.mxu0 %v236
  %327 = vmatpush.bf16.msra.mxu0 %v234
  %328 = vmatpush.bf16.msra.mxu0 %v232
  %329 = vmatmul.bf16.gmra.mxu0 %v85
  %v330 = vpop.f32.mrf.mxu0
  %v331 = vadd.f32 %v317, %v330
  %v332 = vpop.f32.mrf.mxu0
  %v333 = vadd.f32 %v319, %v332
  %334 = vdwg.mxu0
  %v367 = vunpack.c.l.b16 %v19
  %v368 = vunpack.c.h.b16 %v19
  %v369 = vunpack.c.l.b16 %v20
  %v370 = vunpack.c.h.b16 %v20
  %v371 = vunpack.c.l.b16 %v21
  %v372 = vunpack.c.h.b16 %v21
  %v373 = vunpack.c.l.b16 %v22
  %v374 = vunpack.c.h.b16 %v22
  %v375 = vunpack.c.l.b16 %v23
  %v376 = vunpack.c.h.b16 %v23
  %v377 = vunpack.c.l.b16 %v24
  %v378 = vunpack.c.h.b16 %v24
  %v379 = vunpack.c.l.b16 %v25
  %v380 = vunpack.c.h.b16 %v25
  %v381 = vunpack.c.l.b16 %v26
  %v382 = vunpack.c.h.b16 %v26
  %v383 = vunpack.c.l.b16 %v27
  %v384 = vunpack.c.h.b16 %v27
  %v385 = vunpack.c.l.b16 %v28
  %v386 = vunpack.c.h.b16 %v28
  %v387 = vunpack.c.l.b16 %v29
  %v388 = vunpack.c.h.b16 %v29
  %v389 = vunpack.c.l.b16 %v30
  %v390 = vunpack.c.h.b16 %v30
  %v391 = vunpack.c.l.b16 %v31
  %v392 = vunpack.c.h.b16 %v31
  %v393 = vunpack.c.l.b16 %v32
  %v394 = vunpack.c.h.b16 %v32
  %v395 = vunpack.c.l.b16 %v33
  %v396 = vunpack.c.h.b16 %v33
  %v397 = vunpack.c.l.b16 %v34
  %v398 = vunpack.c.h.b16 %v34
  %v399 = vunpack.c.l.b16 %v35
  %v400 = vunpack.c.h.b16 %v35
  %v401 = vunpack.c.l.b16 %v36
  %v402 = vunpack.c.h.b16 %v36
  %v403 = vunpack.c.l.b16 %v37
  %v404 = vunpack.c.h.b16 %v37
  %v405 = vunpack.c.l.b16 %v38
  %v406 = vunpack.c.h.b16 %v38
  %v407 = vunpack.c.l.b16 %v39
  %v408 = vunpack.c.h.b16 %v39
  %v409 = vunpack.c.l.b16 %v40
  %v410 = vunpack.c.h.b16 %v40
  %v411 = vunpack.c.l.b16 %v41
  %v412 = vunpack.c.h.b16 %v41
  %v413 = vunpack.c.l.b16 %v42
  %v414 = vunpack.c.h.b16 %v42
  %v415 = vunpack.c.l.b16 %v43
  %v416 = vunpack.c.h.b16 %v43
  %v417 = vunpack.c.l.b16 %v44
  %v418 = vunpack.c.h.b16 %v44
  %v419 = vunpack.c.l.b16 %v45
  %v420 = vunpack.c.h.b16 %v45
  %v421 = vunpack.c.l.b16 %v46
  %v422 = vunpack.c.h.b16 %v46
  %v423 = vunpack.c.l.b16 %v47
  %v424 = vunpack.c.h.b16 %v47
  %v425 = vunpack.c.l.b16 %v48
  %v426 = vunpack.c.h.b16 %v48
  %v427 = vunpack.c.l.b16 %v49
  %v428 = vunpack.c.h.b16 %v49
  %v429 = vunpack.c.l.b16 %v50
  %v430 = vunpack.c.h.b16 %v50
  %v431 = vpack.c.b16 %v369, %v367
  %v432 = vpack.c.b16 %v370, %v368
  %v433 = vpack.c.b16 %v373, %v371
  %v434 = vpack.c.b16 %v374, %v372
  %v435 = vpack.c.b16 %v377, %v375
  %v436 = vpack.c.b16 %v378, %v376
  %v437 = vpack.c.b16 %v381, %v379
  %v438 = vpack.c.b16 %v382, %v380
  %v439 = vpack.c.b16 %v385, %v383
  %v440 = vpack.c.b16 %v386, %v384
  %v441 = vpack.c.b16 %v389, %v387
  %v442 = vpack.c.b16 %v390, %v388
  %v443 = vpack.c.b16 %v393, %v391
  %v444 = vpack.c.b16 %v394, %v392
  %v445 = vpack.c.b16 %v397, %v395
  %v446 = vpack.c.b16 %v398, %v396
  %v447 = vpack.c.b16 %v401, %v399
  %v448 = vpack.c.b16 %v402, %v400
  %v449 = vpack.c.b16 %v405, %v403
  %v450 = vpack.c.b16 %v406, %v404
  %v451 = vpack.c.b16 %v409, %v407
  %v452 = vpack.c.b16 %v410, %v408
  %v453 = vpack.c.b16 %v413, %v411
  %v454 = vpack.c.b16 %v414, %v412
  %v455 = vpack.c.b16 %v417, %v415
  %v456 = vpack.c.b16 %v418, %v416
  %v457 = vpack.c.b16 %v421, %v419
  %v458 = vpack.c.b16 %v422, %v420
  %v459 = vpack.c.b16 %v425, %v423
  %v460 = vpack.c.b16 %v426, %v424
  %v461 = vpack.c.b16 %v429, %v427
  %v462 = vpack.c.b16 %v430, %v428
  %495 = vmatpush.bf16.msra.mxu0 %v445
  %496 = vmatpush.bf16.msra.mxu0 %v443
  %497 = vmatpush.bf16.msra.mxu0 %v441
  %498 = vmatpush.bf16.msra.mxu0 %v439
  %499 = vmatpush.bf16.msra.mxu0 %v437
  %500 = vmatpush.bf16.msra.mxu0 %v435
  %501 = vmatpush.bf16.msra.mxu0 %v433
  %502 = vmatpush.bf16.msra.mxu0 %v431
  %503 = vmatmul.bf16.gmra.mxu0 %v17
  %v504 = vpop.f32.mrf.mxu0
  %v505 = vadd.f32 %v303, %v504
  %v506 = vpop.f32.mrf.mxu0
  %v507 = vadd.f32 %v305, %v506
  %508 = vdwg.mxu0
  %509 = vmatpush.bf16.msra.mxu0 %v461
  %510 = vmatpush.bf16.msra.mxu0 %v459
  %511 = vmatpush.bf16.msra.mxu0 %v457
  %512 = vmatpush.bf16.msra.mxu0 %v455
  %513 = vmatpush.bf16.msra.mxu0 %v453
  %514 = vmatpush.bf16.msra.mxu0 %v451
  %515 = vmatpush.bf16.msra.mxu0 %v449
  %516 = vmatpush.bf16.msra.mxu0 %v447
  %517 = vmatmul.bf16.gmra.mxu0 %v18
  %v518 = vpop.f32.mrf.mxu0
  %v519 = vadd.f32 %v505, %v518
  %v520 = vpop.f32.mrf.mxu0
  %v521 = vadd.f32 %v507, %v520
  %522 = vdwg.mxu0
  %523 = vmatpush.bf16.msra.mxu0 %v446
  %524 = vmatpush.bf16.msra.mxu0 %v444
  %525 = vmatpush.bf16.msra.mxu0 %v442
  %526 = vmatpush.bf16.msra.mxu0 %v440
  %527 = vmatpush.bf16.msra.mxu0 %v438
  %528 = vmatpush.bf16.msra.mxu0 %v436
  %529 = vmatpush.bf16.msra.mxu0 %v434
  %530 = vmatpush.bf16.msra.mxu0 %v432
  %531 = vmatmul.bf16.gmra.mxu0 %v17
  %v532 = vpop.f32.mrf.mxu0
  %v533 = vadd.f32 %v331, %v532
  %v534 = vpop.f32.mrf.mxu0
  %v535 = vadd.f32 %v333, %v534
  %536 = vdwg.mxu0
  %537 = vmatpush.bf16.msra.mxu0 %v462
  %538 = vmatpush.bf16.msra.mxu0 %v460
  %539 = vmatpush.bf16.msra.mxu0 %v458
  %540 = vmatpush.bf16.msra.mxu0 %v456
  %541 = vmatpush.bf16.msra.mxu0 %v454
  %542 = vmatpush.bf16.msra.mxu0 %v452
  %543 = vmatpush.bf16.msra.mxu0 %v450
  %544 = vmatpush.bf16.msra.mxu0 %v448
  %545 = vmatmul.bf16.gmra.mxu0 %v18
  %v546 = vpop.f32.mrf.mxu0
  %v547 = vadd.f32 %v533, %v546
  %v548 = vpop.f32.mrf.mxu0
  %v549 = vadd.f32 %v535, %v548
  %550 = vdwg.mxu0
  %v551 = vld [vmem:[%s0] sm:$0xfc]
  %v552 = vld [vmem:[%s0 + $0x8] sm:$0xfc]
  %v553 = vld [vmem:[%s0 + $0x10] sm:$0x3]
  %v554 = vld [vmem:[%s0 + $0x18] sm:$0x3]
  %v555 = vld [vmem:[%s0 + $0x20] sm:$0xfc]
  %v556 = vld [vmem:[%s0 + $0x28] sm:$0xfc]
  %v557 = vld [vmem:[%s0 + $0x30] sm:$0x3]
  %v558 = vld [vmem:[%s0 + $0x38] sm:$0x3]
  %vm567 = vcmask 1045504
  %v568 = vrot.slane %v551, 2
  %v569 = vrot.slane %v553, 2
  %v570 = vsel %vm567, %v568, %v569
  %v571 = vrot.slane %v552, 2
  %v572 = vrot.slane %v554, 2
  %v573 = vsel %vm567, %v571, %v572
  %v574 = vrot.slane %v555, 2
  %v575 = vrot.slane %v557, 2
  %v576 = vsel %vm567, %v574, %v575
  %v577 = vrot.slane %v556, 2
  %v578 = vrot.slane %v558, 2
  %v579 = vsel %vm567, %v577, %v578
  %v584 = vpack.c.bf16 %v576, %v570
  %v585 = vpack.c.bf16 %v579, %v573
  %s586 = scalar_lea.vmem %s1, 512
  %v587 = vld [vmem:[%s586] sm:$0xff]
  %v588 = vld [vmem:[%s586 + $0x8] sm:$0xff]
  %v589 = vld [vmem:[%s586 + $0x10] sm:$0xff]
  %v590 = vld [vmem:[%s586 + $0x18] sm:$0xff]
  %v591 = vld [vmem:[%s586 + $0x20] sm:$0xff]
  %v592 = vld [vmem:[%s586 + $0x28] sm:$0xff]
  %v593 = vld [vmem:[%s586 + $0x30] sm:$0xff]
  %v594 = vld [vmem:[%s586 + $0x38] sm:$0xff]
  %v595 = vld [vmem:[%s586 + $0x40] sm:$0xff]
  %v596 = vld [vmem:[%s586 + $0x48] sm:$0xff]
  %v597 = vld [vmem:[%s586 + $0x50] sm:$0xff]
  %v598 = vld [vmem:[%s586 + $0x58] sm:$0xff]
  %v599 = vld [vmem:[%s586 + $0x60] sm:$0xff]
  %v600 = vld [vmem:[%s586 + $0x68] sm:$0xff]
  %v601 = vld [vmem:[%s586 + $0x70] sm:$0xff]
  %v602 = vld [vmem:[%s586 + $0x78] sm:$0xff]
  %v603 = vld [vmem:[%s586 + $0x80] sm:$0xff]
  %v604 = vld [vmem:[%s586 + $0x88] sm:$0xff]
  %v605 = vld [vmem:[%s586 + $0x90] sm:$0xff]
  %v606 = vld [vmem:[%s586 + $0x98] sm:$0xff]
  %v607 = vld [vmem:[%s586 + $0xa0] sm:$0xff]
  %v608 = vld [vmem:[%s586 + $0xa8] sm:$0xff]
  %v609 = vld [vmem:[%s586 + $0xb0] sm:$0xff]
  %v610 = vld [vmem:[%s586 + $0xb8] sm:$0xff]
  %v611 = vld [vmem:[%s586 + $0xc0] sm:$0xff]
  %v612 = vld [vmem:[%s586 + $0xc8] sm:$0xff]
  %v613 = vld [vmem:[%s586 + $0xd0] sm:$0xff]
  %v614 = vld [vmem:[%s586 + $0xd8] sm:$0xff]
  %v615 = vld [vmem:[%s586 + $0xe0] sm:$0xff]
  %v616 = vld [vmem:[%s586 + $0xe8] sm:$0xff]
  %v617 = vld [vmem:[%s586 + $0xf0] sm:$0xff]
  %v618 = vld [vmem:[%s586 + $0xf8] sm:$0xff]
  %v651 = vunpack.c.l.b16 %v587
  %v652 = vunpack.c.h.b16 %v587
  %v653 = vunpack.c.l.b16 %v588
  %v654 = vunpack.c.h.b16 %v588
  %v655 = vunpack.c.l.b16 %v589
  %v656 = vunpack.c.h.b16 %v589
  %v657 = vunpack.c.l.b16 %v590
  %v658 = vunpack.c.h.b16 %v590
  %v659 = vunpack.c.l.b16 %v591
  %v660 = vunpack.c.h.b16 %v591
  %v661 = vunpack.c.l.b16 %v592
  %v662 = vunpack.c.h.b16 %v592
  %v663 = vunpack.c.l.b16 %v593
  %v664 = vunpack.c.h.b16 %v593
  %v665 = vunpack.c.l.b16 %v594
  %v666 = vunpack.c.h.b16 %v594
  %v667 = vunpack.c.l.b16 %v595
  %v668 = vunpack.c.h.b16 %v595
  %v669 = vunpack.c.l.b16 %v596
  %v670 = vunpack.c.h.b16 %v596
  %v671 = vunpack.c.l.b16 %v597
  %v672 = vunpack.c.h.b16 %v597
  %v673 = vunpack.c.l.b16 %v598
  %v674 = vunpack.c.h.b16 %v598
  %v675 = vunpack.c.l.b16 %v599
  %v676 = vunpack.c.h.b16 %v599
  %v677 = vunpack.c.l.b16 %v600
  %v678 = vunpack.c.h.b16 %v600
  %v679 = vunpack.c.l.b16 %v601
  %v680 = vunpack.c.h.b16 %v601
  %v681 = vunpack.c.l.b16 %v602
  %v682 = vunpack.c.h.b16 %v602
  %v683 = vunpack.c.l.b16 %v603
  %v684 = vunpack.c.h.b16 %v603
  %v685 = vunpack.c.l.b16 %v604
  %v686 = vunpack.c.h.b16 %v604
  %v687 = vunpack.c.l.b16 %v605
  %v688 = vunpack.c.h.b16 %v605
  %v689 = vunpack.c.l.b16 %v606
  %v690 = vunpack.c.h.b16 %v606
  %v691 = vunpack.c.l.b16 %v607
  %v692 = vunpack.c.h.b16 %v607
  %v693 = vunpack.c.l.b16 %v608
  %v694 = vunpack.c.h.b16 %v608
  %v695 = vunpack.c.l.b16 %v609
  %v696 = vunpack.c.h.b16 %v609
  %v697 = vunpack.c.l.b16 %v610
  %v698 = vunpack.c.h.b16 %v610
  %v699 = vunpack.c.l.b16 %v611
  %v700 = vunpack.c.h.b16 %v611
  %v701 = vunpack.c.l.b16 %v612
  %v702 = vunpack.c.h.b16 %v612
  %v703 = vunpack.c.l.b16 %v613
  %v704 = vunpack.c.h.b16 %v613
  %v705 = vunpack.c.l.b16 %v614
  %v706 = vunpack.c.h.b16 %v614
  %v707 = vunpack.c.l.b16 %v615
  %v708 = vunpack.c.h.b16 %v615
  %v709 = vunpack.c.l.b16 %v616
  %v710 = vunpack.c.h.b16 %v616
  %v711 = vunpack.c.l.b16 %v617
  %v712 = vunpack.c.h.b16 %v617
  %v713 = vunpack.c.l.b16 %v618
  %v714 = vunpack.c.h.b16 %v618
  %v715 = vpack.c.b16 %v653, %v651
  %v716 = vpack.c.b16 %v654, %v652
  %v717 = vpack.c.b16 %v657, %v655
  %v718 = vpack.c.b16 %v658, %v656
  %v719 = vpack.c.b16 %v661, %v659
  %v720 = vpack.c.b16 %v662, %v660
  %v721 = vpack.c.b16 %v665, %v663
  %v722 = vpack.c.b16 %v666, %v664
  %v723 = vpack.c.b16 %v669, %v667
  %v724 = vpack.c.b16 %v670, %v668
  %v725 = vpack.c.b16 %v673, %v671
  %v726 = vpack.c.b16 %v674, %v672
  %v727 = vpack.c.b16 %v677, %v675
  %v728 = vpack.c.b16 %v678, %v676
  %v729 = vpack.c.b16 %v681, %v679
  %v730 = vpack.c.b16 %v682, %v680
  %v731 = vpack.c.b16 %v685, %v683
  %v732 = vpack.c.b16 %v686, %v684
  %v733 = vpack.c.b16 %v689, %v687
  %v734 = vpack.c.b16 %v690, %v688
  %v735 = vpack.c.b16 %v693, %v691
  %v736 = vpack.c.b16 %v694, %v692
  %v737 = vpack.c.b16 %v697, %v695
  %v738 = vpack.c.b16 %v698, %v696
  %v739 = vpack.c.b16 %v701, %v699
  %v740 = vpack.c.b16 %v702, %v700
  %v741 = vpack.c.b16 %v705, %v703
  %v742 = vpack.c.b16 %v706, %v704
  %v743 = vpack.c.b16 %v709, %v707
  %v744 = vpack.c.b16 %v710, %v708
  %v745 = vpack.c.b16 %v713, %v711
  %v746 = vpack.c.b16 %v714, %v712
  %779 = vmatpush.bf16.msra.mxu0 %v729
  %780 = vmatpush.bf16.msra.mxu0 %v727
  %781 = vmatpush.bf16.msra.mxu0 %v725
  %782 = vmatpush.bf16.msra.mxu0 %v723
  %783 = vmatpush.bf16.msra.mxu0 %v721
  %784 = vmatpush.bf16.msra.mxu0 %v719
  %785 = vmatpush.bf16.msra.mxu0 %v717
  %786 = vmatpush.bf16.msra.mxu0 %v715
  %787 = vmatmul.bf16.gmra.mxu0 %v584
  %v788 = vpop.f32.mrf.mxu0
  %v789 = vadd.f32 0.0, %v788
  %v790 = vpop.f32.mrf.mxu0
  %v791 = vadd.f32 0.0, %v790
  %792 = vdwg.mxu0
  %793 = vmatpush.bf16.msra.mxu0 %v745
  %794 = vmatpush.bf16.msra.mxu0 %v743
  %795 = vmatpush.bf16.msra.mxu0 %v741
  %796 = vmatpush.bf16.msra.mxu0 %v739
  %797 = vmatpush.bf16.msra.mxu0 %v737
  %798 = vmatpush.bf16.msra.mxu0 %v735
  %799 = vmatpush.bf16.msra.mxu0 %v733
  %800 = vmatpush.bf16.msra.mxu0 %v731
  %801 = vmatmul.bf16.gmra.mxu0 %v585
  %v802 = vpop.f32.mrf.mxu0
  %v803 = vadd.f32 %v789, %v802
  %v804 = vpop.f32.mrf.mxu0
  %v805 = vadd.f32 %v791, %v804
  %806 = vdwg.mxu0
  %807 = vmatpush.bf16.msra.mxu0 %v730
  %808 = vmatpush.bf16.msra.mxu0 %v728
  %809 = vmatpush.bf16.msra.mxu0 %v726
  %810 = vmatpush.bf16.msra.mxu0 %v724
  %811 = vmatpush.bf16.msra.mxu0 %v722
  %812 = vmatpush.bf16.msra.mxu0 %v720
  %813 = vmatpush.bf16.msra.mxu0 %v718
  %814 = vmatpush.bf16.msra.mxu0 %v716
  %815 = vmatmul.bf16.gmra.mxu0 %v584
  %v816 = vpop.f32.mrf.mxu0
  %v817 = vadd.f32 0.0, %v816
  %v818 = vpop.f32.mrf.mxu0
  %v819 = vadd.f32 0.0, %v818
  %820 = vdwg.mxu0
  %821 = vmatpush.bf16.msra.mxu0 %v746
  %822 = vmatpush.bf16.msra.mxu0 %v744
  %823 = vmatpush.bf16.msra.mxu0 %v742
  %824 = vmatpush.bf16.msra.mxu0 %v740
  %825 = vmatpush.bf16.msra.mxu0 %v738
  %826 = vmatpush.bf16.msra.mxu0 %v736
  %827 = vmatpush.bf16.msra.mxu0 %v734
  %828 = vmatpush.bf16.msra.mxu0 %v732
  %829 = vmatmul.bf16.gmra.mxu0 %v585
  %v830 = vpop.f32.mrf.mxu0
  %v831 = vadd.f32 %v817, %v830
  %v832 = vpop.f32.mrf.mxu0
  %v833 = vadd.f32 %v819, %v832
  %834 = vdwg.mxu0
  %v835 = vadd.f32 %v519, %v803
  %v836 = vadd.f32 %v547, %v831
  %v837 = vadd.f32 %v521, %v805
  %v838 = vadd.f32 %v549, %v833
  %v839 = vpack.c.bf16 %v836, %v835
  %v840 = vpack.c.bf16 %v838, %v837
  %841 = vst [vmem:[%s2] sm:$0xff] %v839
  %842 = vst [vmem:[%s2 + $0x8] sm:$0xff] %v840
  %v843 = vadd.f32 %v835, %v837
  %v844 = vrot.slane %v843, 4
  %v845 = vadd.f32 %v843, %v844
  %v846 = vrot.slane %v845, 2
  %v847 = vadd.f32 %v845, %v846
  %v848 = vrot.slane %v847, 1
  %v849 = vadd.f32 %v847, %v848
  %v850 = vadd.f32 %v836, %v838
  %v851 = vrot.slane %v850, 4
  %v852 = vadd.f32 %v850, %v851
  %v853 = vrot.slane %v852, 2
  %v854 = vadd.f32 %v852, %v853
  %v855 = vrot.slane %v854, 1
  %v856 = vadd.f32 %v854, %v855
  %v857 = vmul.f32 %v835, %v835
  %v858 = vmul.f32 %v836, %v836
  %v859 = vmul.f32 %v837, %v837
  %v860 = vmul.f32 %v838, %v838
  %v861 = vadd.f32 %v857, %v859
  %v862 = vrot.slane %v861, 4
  %v863 = vadd.f32 %v861, %v862
  %v864 = vrot.slane %v863, 2
  %v865 = vadd.f32 %v863, %v864
  %v866 = vrot.slane %v865, 1
  %v867 = vadd.f32 %v865, %v866
  %v868 = vadd.f32 %v858, %v860
  %v869 = vrot.slane %v868, 4
  %v870 = vadd.f32 %v868, %v869
  %v871 = vrot.slane %v870, 2
  %v872 = vadd.f32 %v870, %v871
  %v873 = vrot.slane %v872, 1
  %v874 = vadd.f32 %v872, %v873
  %vm875 = vcmask 1040384
  %v876 = vsel %vm875, %v849, %v867
  %v877 = vsel %vm875, %v856, %v874
  %v880 = vrot.slane %v877, 6
  %vm881 = vcmask 1041408
  %v882 = vsel %vm881, %v876, %v880
  %884 = vst [vmem:[%s3] sm:$0xf] %v882
  // Predicated region
  $region10: #{local_attention.3} parent=0 // pred_check
    _
  $region11: #{local_attention.3} parent=0 // pred_check_branch
    %886 = sbr.rel (0) target = $region13
  $region12: #{local_attention.3} parent=0 // pred_region
    _
  $region13: #{local_attention.3} parent=0 // pred_fallthru
    _
  // Predicated region
  $region14: #{local_attention.3} parent=0 // pred_check
    _
  $region15: #{local_attention.3} parent=0 // pred_check_branch
    %888 = sbr.rel (0) target = $region17
  $region16: #{local_attention.3} parent=0 // pred_region
    _
  $region17: #{local_attention.3} parent=0 // pred_fallthru
    _
  // Predicated region
  $region18: #{local_attention.3} parent=0 // pred_check
    _
  $region19: #{local_attention.3} parent=0 // pred_check_branch
    %890 = sbr.rel (0) target = $region21
  $region20: #{local_attention.3} parent=0 // pred_region
    _
  $region21: #{local_attention.3} parent=0 // pred_fallthru
    _
  // Predicated region
  $region22: #{local_attention.3} parent=0 // pred_check
    _
  $region23: #{local_attention.3} parent=0 // pred_check_branch
    %892 = sbr.rel (0) target = $region25
  $region24: #{local_attention.3} parent=0 // pred_region
    _
  $region25: #{local_attention.3} parent=0 // pred_fallthru
    _

// kernel: local_attention.4
$region0: #{local_attention.4}
  #allocation0 [shape = 'u32[]', space=smem, size = 0x4, offset = 0x4, fixed_abs, tag = 'smem constant byte address 0x4 - core index']
  #allocation1 [shape = 'u32[72,128]{1,0:T(1,128)}', space=vmem, size = 0x9000, scoped, tag = 'internal scratch']
  %s0 = inlined_call_operand.vmem [shape: bf16[16,256], index: 0, kind: input, shape index: {}]
  %s1 = inlined_call_operand.vmem [shape: f32[1,256], index: 1, kind: input, shape index: {}]
  %s2 = inlined_call_operand.vmem [shape: f32[1,256], index: 2, kind: input, shape index: {}]
  %s3 = inlined_call_operand.vmem [shape: bf16[256,256], index: 3, kind: input, shape index: {}]
  %s4 = inlined_call_operand.vmem [shape: f32[1,2,256], index: 4, kind: output, shape index: {}]
  %s5 = sld [smem:[#allocation0]]
  $region26: #{local_attention.4} parent=0
    _
  %s7 = ssub.s32 1, %s5
  %s8 = scalar_select 0, %s7, %s5
  // Predicated region
  $region2: #{local_attention.4} parent=0 // pred_check
    _
  $region3: #{local_attention.4} parent=0 // pred_check_branch
    %10 = sbr.rel (0) target = $region5
  $region4: #{local_attention.4} parent=0 // pred_region
    _
  $region5: #{local_attention.4} parent=0 // pred_fallthru
    _
  // Predicated region
  $region6: #{local_attention.4} parent=0 // pred_check
    _
  $region7: #{local_attention.4} parent=0 // pred_check_branch
    %12 = sbr.rel (0) target = $region9
  $region8: #{local_attention.4} parent=0 // pred_region
    _
  $region9: #{local_attention.4} parent=0 // pred_fallthru
    _
  // Predicated region
  $region10: #{local_attention.4} parent=0 // pred_check
    _
  $region11: #{local_attention.4} parent=0 // pred_check_branch
    %14 = sbr.rel (0) target = $region13
  $region12: #{local_attention.4} parent=0 // pred_region
    _
  $region13: #{local_attention.4} parent=0 // pred_fallthru
    _
  // Predicated region
  $region14: #{local_attention.4} parent=0 // pred_check
    _
  $region15: #{local_attention.4} parent=0 // pred_check_branch
    %16 = sbr.rel (0) target = $region17
  $region16: #{local_attention.4} parent=0 // pred_region
    _
  $region17: #{local_attention.4} parent=0 // pred_fallthru
    _
  %v17 = vld [vmem:[%s0] sm:$0xff]
  %v18 = vld [vmem:[%s0 + $0x8] sm:$0xff]
  %v19 = vunpack.c.l.bf16 %v17
  %v20 = vunpack.c.h.bf16 %v17
  %v21 = vunpack.c.l.bf16 %v18
  %v22 = vunpack.c.h.bf16 %v18
  %v23 = vld [vmem:[%s1] sm:$0x3]
  %v25 = vperm.slane %v23, 0
  %v26 = vperm.slane %v23, 1
  %v29 = vmul.f32 %v19, %v25
  %v30 = vmul.f32 %v20, %v26
  %v31 = vmul.f32 %v21, %v25
  %v32 = vmul.f32 %v22, %v26
  %v33 = vld [vmem:[%s2] sm:$0x3]
  %v35 = vperm.slane %v33, 0
  %v36 = vperm.slane %v33, 1
  %v39 = vadd.f32 %v29, %v35
  %v40 = vadd.f32 %v30, %v36
  %v41 = vadd.f32 %v31, %v35
  %v42 = vadd.f32 %v32, %v36
  %v43 = vmax.f32 %v39, 0.0
  %v44 = vmax.f32 %v40, 0.0
  %v45 = vmax.f32 %v41, 0.0
  %v46 = vmax.f32 %v42, 0.0
  %v47 = vpack.c.bf16 %v45, %v43
  %v48 = vpack.c.bf16 %v46, %v44
  %v49 = vld [vmem:[%s3] sm:$0xff]
  %v50 = vld [vmem:[%s3 + $0x8] sm:$0xff]
  %v51 = vld [vmem:[%s3 + $0x10] sm:$0xff]
  %v52 = vld [vmem:[%s3 + $0x18] sm:$0xff]
  %v53 = vld [vmem:[%s3 + $0x20] sm:$0xff]
  %v54 = vld [vmem:[%s3 + $0x28] sm:$0xff]
  %v55 = vld [vmem:[%s3 + $0x30] sm:$0xff]
  %v56 = vld [vmem:[%s3 + $0x38] sm:$0xff]
  %v57 = vld [vmem:[%s3 + $0x40] sm:$0xff]
  %v58 = vld [vmem:[%s3 + $0x48] sm:$0xff]
  %v59 = vld [vmem:[%s3 + $0x50] sm:$0xff]
  %v60 = vld [vmem:[%s3 + $0x58] sm:$0xff]
  %v61 = vld [vmem:[%s3 + $0x60] sm:$0xff]
  %v62 = vld [vmem:[%s3 + $0x68] sm:$0xff]
  %v63 = vld [vmem:[%s3 + $0x70] sm:$0xff]
  %v64 = vld [vmem:[%s3 + $0x78] sm:$0xff]
  %v65 = vld [vmem:[%s3 + $0x80] sm:$0xff]
  %v66 = vld [vmem:[%s3 + $0x88] sm:$0xff]
  %v67 = vld [vmem:[%s3 + $0x90] sm:$0xff]
  %v68 = vld [vmem:[%s3 + $0x98] sm:$0xff]
  %v69 = vld [vmem:[%s3 + $0xa0] sm:$0xff]
  %v70 = vld [vmem:[%s3 + $0xa8] sm:$0xff]
  %v71 = vld [vmem:[%s3 + $0xb0] sm:$0xff]
  %v72 = vld [vmem:[%s3 + $0xb8] sm:$0xff]
  %v73 = vld [vmem:[%s3 + $0xc0] sm:$0xff]
  %v74 = vld [vmem:[%s3 + $0xc8] sm:$0xff]
  %v75 = vld [vmem:[%s3 + $0xd0] sm:$0xff]
  %v76 = vld [vmem:[%s3 + $0xd8] sm:$0xff]
  %v77 = vld [vmem:[%s3 + $0xe0] sm:$0xff]
  %v78 = vld [vmem:[%s3 + $0xe8] sm:$0xff]
  %v79 = vld [vmem:[%s3 + $0xf0] sm:$0xff]
  %v80 = vld [vmem:[%s3 + $0xf8] sm:$0xff]
  %v113 = vunpack.c.l.b16 %v49
  %v114 = vunpack.c.h.b16 %v49
  %v115 = vunpack.c.l.b16 %v50
  %v116 = vunpack.c.h.b16 %v50
  %v117 = vunpack.c.l.b16 %v51
  %v118 = vunpack.c.h.b16 %v51
  %v119 = vunpack.c.l.b16 %v52
  %v120 = vunpack.c.h.b16 %v52
  %v121 = vunpack.c.l.b16 %v53
  %v122 = vunpack.c.h.b16 %v53
  %v123 = vunpack.c.l.b16 %v54
  %v124 = vunpack.c.h.b16 %v54
  %v125 = vunpack.c.l.b16 %v55
  %v126 = vunpack.c.h.b16 %v55
  %v127 = vunpack.c.l.b16 %v56
  %v128 = vunpack.c.h.b16 %v56
  %v129 = vunpack.c.l.b16 %v57
  %v130 = vunpack.c.h.b16 %v57
  %v131 = vunpack.c.l.b16 %v58
  %v132 = vunpack.c.h.b16 %v58
  %v133 = vunpack.c.l.b16 %v59
  %v134 = vunpack.c.h.b16 %v59
  %v135 = vunpack.c.l.b16 %v60
  %v136 = vunpack.c.h.b16 %v60
  %v137 = vunpack.c.l.b16 %v61
  %v138 = vunpack.c.h.b16 %v61
  %v139 = vunpack.c.l.b16 %v62
  %v140 = vunpack.c.h.b16 %v62
  %v141 = vunpack.c.l.b16 %v63
  %v142 = vunpack.c.h.b16 %v63
  %v143 = vunpack.c.l.b16 %v64
  %v144 = vunpack.c.h.b16 %v64
  %v145 = vunpack.c.l.b16 %v65
  %v146 = vunpack.c.h.b16 %v65
  %v147 = vunpack.c.l.b16 %v66
  %v148 = vunpack.c.h.b16 %v66
  %v149 = vunpack.c.l.b16 %v67
  %v150 = vunpack.c.h.b16 %v67
  %v151 = vunpack.c.l.b16 %v68
  %v152 = vunpack.c.h.b16 %v68
  %v153 = vunpack.c.l.b16 %v69
  %v154 = vunpack.c.h.b16 %v69
  %v155 = vunpack.c.l.b16 %v70
  %v156 = vunpack.c.h.b16 %v70
  %v157 = vunpack.c.l.b16 %v71
  %v158 = vunpack.c.h.b16 %v71
  %v159 = vunpack.c.l.b16 %v72
  %v160 = vunpack.c.h.b16 %v72
  %v161 = vunpack.c.l.b16 %v73
  %v162 = vunpack.c.h.b16 %v73
  %v163 = vunpack.c.l.b16 %v74
  %v164 = vunpack.c.h.b16 %v74
  %v165 = vunpack.c.l.b16 %v75
  %v166 = vunpack.c.h.b16 %v75
  %v167 = vunpack.c.l.b16 %v76
  %v168 = vunpack.c.h.b16 %v76
  %v169 = vunpack.c.l.b16 %v77
  %v170 = vunpack.c.h.b16 %v77
  %v171 = vunpack.c.l.b16 %v78
  %v172 = vunpack.c.h.b16 %v78
  %v173 = vunpack.c.l.b16 %v79
  %v174 = vunpack.c.h.b16 %v79
  %v175 = vunpack.c.l.b16 %v80
  %v176 = vunpack.c.h.b16 %v80
  %v177 = vpack.c.b16 %v115, %v113
  %v178 = vpack.c.b16 %v116, %v114
  %v179 = vpack.c.b16 %v119, %v117
  %v180 = vpack.c.b16 %v120, %v118
  %v181 = vpack.c.b16 %v123, %v121
  %v182 = vpack.c.b16 %v124, %v122
  %v183 = vpack.c.b16 %v127, %v125
  %v184 = vpack.c.b16 %v128, %v126
  %v185 = vpack.c.b16 %v131, %v129
  %v186 = vpack.c.b16 %v132, %v130
  %v187 = vpack.c.b16 %v135, %v133
  %v188 = vpack.c.b16 %v136, %v134
  %v189 = vpack.c.b16 %v139, %v137
  %v190 = vpack.c.b16 %v140, %v138
  %v191 = vpack.c.b16 %v143, %v141
  %v192 = vpack.c.b16 %v144, %v142
  %v193 = vpack.c.b16 %v147, %v145
  %v194 = vpack.c.b16 %v148, %v146
  %v195 = vpack.c.b16 %v151, %v149
  %v196 = vpack.c.b16 %v152, %v150
  %v197 = vpack.c.b16 %v155, %v153
  %v198 = vpack.c.b16 %v156, %v154
  %v199 = vpack.c.b16 %v159, %v157
  %v200 = vpack.c.b16 %v160, %v158
  %v201 = vpack.c.b16 %v163, %v161
  %v202 = vpack.c.b16 %v164, %v162
  %v203 = vpack.c.b16 %v167, %v165
  %v204 = vpack.c.b16 %v168, %v166
  %v205 = vpack.c.b16 %v171, %v169
  %v206 = vpack.c.b16 %v172, %v170
  %v207 = vpack.c.b16 %v175, %v173
  %v208 = vpack.c.b16 %v176, %v174
  %241 = vmatpush.bf16.msra.mxu0 %v191
  %242 = vmatpush.bf16.msra.mxu0 %v189
  %243 = vmatpush.bf16.msra.mxu0 %v187
  %244 = vmatpush.bf16.msra.mxu0 %v185
  %245 = vmatpush.bf16.msra.mxu0 %v183
  %246 = vmatpush.bf16.msra.mxu0 %v181
  %247 = vmatpush.bf16.msra.mxu0 %v179
  %248 = vmatpush.bf16.msra.mxu0 %v177
  %249 = vmatmul.bf16.gmra.mxu0 %v47
  %v250 = vpop.f32.mrf.mxu0
  %v251 = vadd.f32 0.0, %v250
  %v252 = vpop.f32.mrf.mxu0
  %v253 = vadd.f32 0.0, %v252
  %254 = vdwg.mxu0
  %255 = vmatpush.bf16.msra.mxu0 %v207
  %256 = vmatpush.bf16.msra.mxu0 %v205
  %257 = vmatpush.bf16.msra.mxu0 %v203
  %258 = vmatpush.bf16.msra.mxu0 %v201
  %259 = vmatpush.bf16.msra.mxu0 %v199
  %260 = vmatpush.bf16.msra.mxu0 %v197
  %261 = vmatpush.bf16.msra.mxu0 %v195
  %262 = vmatpush.bf16.msra.mxu0 %v193
  %263 = vmatmul.bf16.gmra.mxu0 %v48
  %v264 = vpop.f32.mrf.mxu0
  %v265 = vadd.f32 %v251, %v264
  %v266 = vpop.f32.mrf.mxu0
  %v267 = vadd.f32 %v253, %v266
  %268 = vdwg.mxu0
  %269 = vmatpush.bf16.msra.mxu0 %v192
  %270 = vmatpush.bf16.msra.mxu0 %v190
  %271 = vmatpush.bf16.msra.mxu0 %v188
  %272 = vmatpush.bf16.msra.mxu0 %v186
  %273 = vmatpush.bf16.msra.mxu0 %v184
  %274 = vmatpush.bf16.msra.mxu0 %v182
  %275 = vmatpush.bf16.msra.mxu0 %v180
  %276 = vmatpush.bf16.msra.mxu0 %v178
  %277 = vmatmul.bf16.gmra.mxu0 %v47
  %v278 = vpop.f32.mrf.mxu0
  %v279 = vadd.f32 0.0, %v278
  %v280 = vpop.f32.mrf.mxu0
  %v281 = vadd.f32 0.0, %v280
  %282 = vdwg.mxu0
  %283 = vmatpush.bf16.msra.mxu0 %v208
  %284 = vmatpush.bf16.msra.mxu0 %v206
  %285 = vmatpush.bf16.msra.mxu0 %v204
  %286 = vmatpush.bf16.msra.mxu0 %v202
  %287 = vmatpush.bf16.msra.mxu0 %v200
  %288 = vmatpush.bf16.msra.mxu0 %v198
  %289 = vmatpush.bf16.msra.mxu0 %v196
  %290 = vmatpush.bf16.msra.mxu0 %v194
  %291 = vmatmul.bf16.gmra.mxu0 %v48
  %v292 = vpop.f32.mrf.mxu0
  %v293 = vadd.f32 %v279, %v292
  %v294 = vpop.f32.mrf.mxu0
  %v295 = vadd.f32 %v281, %v294
  %296 = vdwg.mxu0
  %v297 = vadd.f32 %v265, %v267
  %v298 = vrot.slane %v297, 4
  %v299 = vadd.f32 %v297, %v298
  %v300 = vrot.slane %v299, 2
  %v301 = vadd.f32 %v299, %v300
  %v302 = vrot.slane %v301, 1
  %v303 = vadd.f32 %v301, %v302
  %v304 = vadd.f32 %v293, %v295
  %v305 = vrot.slane %v304, 4
  %v306 = vadd.f32 %v304, %v305
  %v307 = vrot.slane %v306, 2
  %v308 = vadd.f32 %v306, %v307
  %v309 = vrot.slane %v308, 1
  %v310 = vadd.f32 %v308, %v309
  %v311 = vmul.f32 %v265, %v265
  %v312 = vmul.f32 %v293, %v293
  %v313 = vmul.f32 %v267, %v267
  %v314 = vmul.f32 %v295, %v295
  %v315 = vadd.f32 %v311, %v313
  %v316 = vrot.slane %v315, 4
  %v317 = vadd.f32 %v315, %v316
  %v318 = vrot.slane %v317, 2
  %v319 = vadd.f32 %v317, %v318
  %v320 = vrot.slane %v319, 1
  %v321 = vadd.f32 %v319, %v320
  %v322 = vadd.f32 %v312, %v314
  %v323 = vrot.slane %v322, 4
  %v324 = vadd.f32 %v322, %v323
  %v325 = vrot.slane %v324, 2
  %v326 = vadd.f32 %v324, %v325
  %v327 = vrot.slane %v326, 1
  %v328 = vadd.f32 %v326, %v327
  %vm329 = vcmask 1040384
  %v330 = vsel %vm329, %v303, %v321
  %v331 = vsel %vm329, %v310, %v328
  %v334 = vrot.slane %v331, 6
  %vm335 = vcmask 1041408
  %v336 = vsel %vm335, %v330, %v334
  %338 = vst [vmem:[%s4] sm:$0xf] %v336
  // Predicated region
  $region18: #{local_attention.4} parent=0 // pred_check
    _
  $region19: #{local_attention.4} parent=0 // pred_check_branch
    %340 = sbr.rel (0) target = $region21
  $region20: #{local_attention.4} parent=0 // pred_region
    _
  $region21: #{local_attention.4} parent=0 // pred_fallthru
    _
  // Predicated region
  $region22: #{local_attention.4} parent=0 // pred_check
    _
  $region23: #{local_attention.4} parent=0 // pred_check_branch
    %342 = sbr.rel (0) target = $region25
  $region24: #{local_attention.4} parent=0 // pred_region
    _
  $region25: #{local_attention.4} parent=0 // pred_fallthru
    _

// kernel: local_attention.5
$region0: #{local_attention.5}
  #allocation0 [shape = 'u32[]', space=smem, size = 0x4, offset = 0x4, fixed_abs, tag = 'smem constant byte address 0x4 - core index']
  #allocation1 [shape = 'u32[72,128]{1,0:T(1,128)}', space=vmem, size = 0x9000, scoped, tag = 'internal scratch']
  %s0 = inlined_call_operand.vmem [shape: bf16[16,256], index: 0, kind: input, shape index: {}]
  %s1 = inlined_call_operand.vmem [shape: f32[1,256], index: 1, kind: input, shape index: {}]
  %s2 = inlined_call_operand.vmem [shape: f32[1,256], index: 2, kind: input, shape index: {}]
  %s3 = inlined_call_operand.vmem [shape: bf16[256,256], index: 3, kind: input, shape index: {}]
  %s4 = inlined_call_operand.vmem [shape: f32[1,256], index: 4, kind: input, shape index: {}]
  %s5 = inlined_call_operand.vmem [shape: f32[16,256], index: 5, kind: output, shape index: {}]
  %s6 = sld [smem:[#allocation0]]
  $region30: #{local_attention.5} parent=0
    _
  %s8 = ssub.s32 1, %s6
  %s9 = scalar_select 0, %s8, %s6
  // Predicated region
  $region2: #{local_attention.5} parent=0 // pred_check
    _
  $region3: #{local_attention.5} parent=0 // pred_check_branch
    %11 = sbr.rel (0) target = $region5
  $region4: #{local_attention.5} parent=0 // pred_region
    _
  $region5: #{local_attention.5} parent=0 // pred_fallthru
    _
  // Predicated region
  $region6: #{local_attention.5} parent=0 // pred_check
    _
  $region7: #{local_attention.5} parent=0 // pred_check_branch
    %13 = sbr.rel (0) target = $region9
  $region8: #{local_attention.5} parent=0 // pred_region
    _
  $region9: #{local_attention.5} parent=0 // pred_fallthru
    _
  // Predicated region
  $region10: #{local_attention.5} parent=0 // pred_check
    _
  $region11: #{local_attention.5} parent=0 // pred_check_branch
    %15 = sbr.rel (0) target = $region13
  $region12: #{local_attention.5} parent=0 // pred_region
    _
  $region13: #{local_attention.5} parent=0 // pred_fallthru
    _
  // Predicated region
  $region14: #{local_attention.5} parent=0 // pred_check
    _
  $region15: #{local_attention.5} parent=0 // pred_check_branch
    %17 = sbr.rel (0) target = $region17
  $region16: #{local_attention.5} parent=0 // pred_region
    _
  $region17: #{local_attention.5} parent=0 // pred_fallthru
    _
  // Predicated region
  $region18: #{local_attention.5} parent=0 // pred_check
    _
  $region19: #{local_attention.5} parent=0 // pred_check_branch
    %19 = sbr.rel (0) target = $region21
  $region20: #{local_attention.5} parent=0 // pred_region
    _
  $region21: #{local_attention.5} parent=0 // pred_fallthru
    _
  %v20 = vld [vmem:[%s0] sm:$0xff]
  %v21 = vld [vmem:[%s0 + $0x8] sm:$0xff]
  %v22 = vunpack.c.l.bf16 %v20
  %v23 = vunpack.c.h.bf16 %v20
  %v24 = vunpack.c.l.bf16 %v21
  %v25 = vunpack.c.h.bf16 %v21
  %v26 = vld [vmem:[%s1] sm:$0x3]
  %v28 = vperm.slane %v26, 0
  %v29 = vperm.slane %v26, 1
  %v32 = vmul.f32 %v22, %v28
  %v33 = vmul.f32 %v23, %v29
  %v34 = vmul.f32 %v24, %v28
  %v35 = vmul.f32 %v25, %v29
  %v36 = vld [vmem:[%s2] sm:$0x3]
  %v38 = vperm.slane %v36, 0
  %v39 = vperm.slane %v36, 1
  %v42 = vadd.f32 %v32, %v38
  %v43 = vadd.f32 %v33, %v39
  %v44 = vadd.f32 %v34, %v38
  %v45 = vadd.f32 %v35, %v39
  %v46 = vmax.f32 %v42, 0.0
  %v47 = vmax.f32 %v43, 0.0
  %v48 = vmax.f32 %v44, 0.0
  %v49 = vmax.f32 %v45, 0.0
  %v50 = vpack.c.bf16 %v48, %v46
  %v51 = vpack.c.bf16 %v49, %v47
  %v52 = vld [vmem:[%s3] sm:$0xff]
  %v53 = vld [vmem:[%s3 + $0x8] sm:$0xff]
  %v54 = vld [vmem:[%s3 + $0x10] sm:$0xff]
  %v55 = vld [vmem:[%s3 + $0x18] sm:$0xff]
  %v56 = vld [vmem:[%s3 + $0x20] sm:$0xff]
  %v57 = vld [vmem:[%s3 + $0x28] sm:$0xff]
  %v58 = vld [vmem:[%s3 + $0x30] sm:$0xff]
  %v59 = vld [vmem:[%s3 + $0x38] sm:$0xff]
  %v60 = vld [vmem:[%s3 + $0x40] sm:$0xff]
  %v61 = vld [vmem:[%s3 + $0x48] sm:$0xff]
  %v62 = vld [vmem:[%s3 + $0x50] sm:$0xff]
  %v63 = vld [vmem:[%s3 + $0x58] sm:$0xff]
  %v64 = vld [vmem:[%s3 + $0x60] sm:$0xff]
  %v65 = vld [vmem:[%s3 + $0x68] sm:$0xff]
  %v66 = vld [vmem:[%s3 + $0x70] sm:$0xff]
  %v67 = vld [vmem:[%s3 + $0x78] sm:$0xff]
  %v68 = vld [vmem:[%s3 + $0x80] sm:$0xff]
  %v69 = vld [vmem:[%s3 + $0x88] sm:$0xff]
  %v70 = vld [vmem:[%s3 + $0x90] sm:$0xff]
  %v71 = vld [vmem:[%s3 + $0x98] sm:$0xff]
  %v72 = vld [vmem:[%s3 + $0xa0] sm:$0xff]
  %v73 = vld [vmem:[%s3 + $0xa8] sm:$0xff]
  %v74 = vld [vmem:[%s3 + $0xb0] sm:$0xff]
  %v75 = vld [vmem:[%s3 + $0xb8] sm:$0xff]
  %v76 = vld [vmem:[%s3 + $0xc0] sm:$0xff]
  %v77 = vld [vmem:[%s3 + $0xc8] sm:$0xff]
  %v78 = vld [vmem:[%s3 + $0xd0] sm:$0xff]
  %v79 = vld [vmem:[%s3 + $0xd8] sm:$0xff]
  %v80 = vld [vmem:[%s3 + $0xe0] sm:$0xff]
  %v81 = vld [vmem:[%s3 + $0xe8] sm:$0xff]
  %v82 = vld [vmem:[%s3 + $0xf0] sm:$0xff]
  %v83 = vld [vmem:[%s3 + $0xf8] sm:$0xff]
  %v84 = vld [vmem:[%s4] sm:$0x3]
  %v86 = vperm.slane %v84, 0
  %v87 = vperm.slane %v84, 1
  %v122 = vunpack.c.l.b16 %v52
  %v123 = vunpack.c.h.b16 %v52
  %v124 = vunpack.c.l.b16 %v53
  %v125 = vunpack.c.h.b16 %v53
  %v126 = vunpack.c.l.b16 %v54
  %v127 = vunpack.c.h.b16 %v54
  %v128 = vunpack.c.l.b16 %v55
  %v129 = vunpack.c.h.b16 %v55
  %v130 = vunpack.c.l.b16 %v56
  %v131 = vunpack.c.h.b16 %v56
  %v132 = vunpack.c.l.b16 %v57
  %v133 = vunpack.c.h.b16 %v57
  %v134 = vunpack.c.l.b16 %v58
  %v135 = vunpack.c.h.b16 %v58
  %v136 = vunpack.c.l.b16 %v59
  %v137 = vunpack.c.h.b16 %v59
  %v138 = vunpack.c.l.b16 %v60
  %v139 = vunpack.c.h.b16 %v60
  %v140 = vunpack.c.l.b16 %v61
  %v141 = vunpack.c.h.b16 %v61
  %v142 = vunpack.c.l.b16 %v62
  %v143 = vunpack.c.h.b16 %v62
  %v144 = vunpack.c.l.b16 %v63
  %v145 = vunpack.c.h.b16 %v63
  %v146 = vunpack.c.l.b16 %v64
  %v147 = vunpack.c.h.b16 %v64
  %v148 = vunpack.c.l.b16 %v65
  %v149 = vunpack.c.h.b16 %v65
  %v150 = vunpack.c.l.b16 %v66
  %v151 = vunpack.c.h.b16 %v66
  %v152 = vunpack.c.l.b16 %v67
  %v153 = vunpack.c.h.b16 %v67
  %v154 = vunpack.c.l.b16 %v68
  %v155 = vunpack.c.h.b16 %v68
  %v156 = vunpack.c.l.b16 %v69
  %v157 = vunpack.c.h.b16 %v69
  %v158 = vunpack.c.l.b16 %v70
  %v159 = vunpack.c.h.b16 %v70
  %v160 = vunpack.c.l.b16 %v71
  %v161 = vunpack.c.h.b16 %v71
  %v162 = vunpack.c.l.b16 %v72
  %v163 = vunpack.c.h.b16 %v72
  %v164 = vunpack.c.l.b16 %v73
  %v165 = vunpack.c.h.b16 %v73
  %v166 = vunpack.c.l.b16 %v74
  %v167 = vunpack.c.h.b16 %v74
  %v168 = vunpack.c.l.b16 %v75
  %v169 = vunpack.c.h.b16 %v75
  %v170 = vunpack.c.l.b16 %v76
  %v171 = vunpack.c.h.b16 %v76
  %v172 = vunpack.c.l.b16 %v77
  %v173 = vunpack.c.h.b16 %v77
  %v174 = vunpack.c.l.b16 %v78
  %v175 = vunpack.c.h.b16 %v78
  %v176 = vunpack.c.l.b16 %v79
  %v177 = vunpack.c.h.b16 %v79
  %v178 = vunpack.c.l.b16 %v80
  %v179 = vunpack.c.h.b16 %v80
  %v180 = vunpack.c.l.b16 %v81
  %v181 = vunpack.c.h.b16 %v81
  %v182 = vunpack.c.l.b16 %v82
  %v183 = vunpack.c.h.b16 %v82
  %v184 = vunpack.c.l.b16 %v83
  %v185 = vunpack.c.h.b16 %v83
  %v186 = vpack.c.b16 %v124, %v122
  %v187 = vpack.c.b16 %v125, %v123
  %v188 = vpack.c.b16 %v128, %v126
  %v189 = vpack.c.b16 %v129, %v127
  %v190 = vpack.c.b16 %v132, %v130
  %v191 = vpack.c.b16 %v133, %v131
  %v192 = vpack.c.b16 %v136, %v134
  %v193 = vpack.c.b16 %v137, %v135
  %v194 = vpack.c.b16 %v140, %v138
  %v195 = vpack.c.b16 %v141, %v139
  %v196 = vpack.c.b16 %v144, %v142
  %v197 = vpack.c.b16 %v145, %v143
  %v198 = vpack.c.b16 %v148, %v146
  %v199 = vpack.c.b16 %v149, %v147
  %v200 = vpack.c.b16 %v152, %v150
  %v201 = vpack.c.b16 %v153, %v151
  %v202 = vpack.c.b16 %v156, %v154
  %v203 = vpack.c.b16 %v157, %v155
  %v204 = vpack.c.b16 %v160, %v158
  %v205 = vpack.c.b16 %v161, %v159
  %v206 = vpack.c.b16 %v164, %v162
  %v207 = vpack.c.b16 %v165, %v163
  %v208 = vpack.c.b16 %v168, %v166
  %v209 = vpack.c.b16 %v169, %v167
  %v210 = vpack.c.b16 %v172, %v170
  %v211 = vpack.c.b16 %v173, %v171
  %v212 = vpack.c.b16 %v176, %v174
  %v213 = vpack.c.b16 %v177, %v175
  %v214 = vpack.c.b16 %v180, %v178
  %v215 = vpack.c.b16 %v181, %v179
  %v216 = vpack.c.b16 %v184, %v182
  %v217 = vpack.c.b16 %v185, %v183
  %250 = vmatpush.bf16.msra.mxu0 %v200
  %251 = vmatpush.bf16.msra.mxu0 %v198
  %252 = vmatpush.bf16.msra.mxu0 %v196
  %253 = vmatpush.bf16.msra.mxu0 %v194
  %254 = vmatpush.bf16.msra.mxu0 %v192
  %255 = vmatpush.bf16.msra.mxu0 %v190
  %256 = vmatpush.bf16.msra.mxu0 %v188
  %257 = vmatpush.bf16.msra.mxu0 %v186
  %258 = vmatmul.bf16.gmra.mxu0 %v50
  %v259 = vpop.f32.mrf.mxu0
  %v260 = vadd.f32 %v86, %v259
  %v261 = vpop.f32.mrf.mxu0
  %v262 = vadd.f32 %v86, %v261
  %263 = vdwg.mxu0
  %264 = vmatpush.bf16.msra.mxu0 %v216
  %265 = vmatpush.bf16.msra.mxu0 %v214
  %266 = vmatpush.bf16.msra.mxu0 %v212
  %267 = vmatpush.bf16.msra.mxu0 %v210
  %268 = vmatpush.bf16.msra.mxu0 %v208
  %269 = vmatpush.bf16.msra.mxu0 %v206
  %270 = vmatpush.bf16.msra.mxu0 %v204
  %271 = vmatpush.bf16.msra.mxu0 %v202
  %272 = vmatmul.bf16.gmra.mxu0 %v51
  %v273 = vpop.f32.mrf.mxu0
  %v274 = vadd.f32 %v260, %v273
  %v275 = vpop.f32.mrf.mxu0
  %v276 = vadd.f32 %v262, %v275
  %277 = vdwg.mxu0
  %278 = vmatpush.bf16.msra.mxu0 %v201
  %279 = vmatpush.bf16.msra.mxu0 %v199
  %280 = vmatpush.bf16.msra.mxu0 %v197
  %281 = vmatpush.bf16.msra.mxu0 %v195
  %282 = vmatpush.bf16.msra.mxu0 %v193
  %283 = vmatpush.bf16.msra.mxu0 %v191
  %284 = vmatpush.bf16.msra.mxu0 %v189
  %285 = vmatpush.bf16.msra.mxu0 %v187
  %286 = vmatmul.bf16.gmra.mxu0 %v50
  %v287 = vpop.f32.mrf.mxu0
  %v288 = vadd.f32 %v87, %v287
  %v289 = vpop.f32.mrf.mxu0
  %v290 = vadd.f32 %v87, %v289
  %291 = vdwg.mxu0
  %292 = vmatpush.bf16.msra.mxu0 %v217
  %293 = vmatpush.bf16.msra.mxu0 %v215
  %294 = vmatpush.bf16.msra.mxu0 %v213
  %295 = vmatpush.bf16.msra.mxu0 %v211
  %296 = vmatpush.bf16.msra.mxu0 %v209
  %297 = vmatpush.bf16.msra.mxu0 %v207
  %298 = vmatpush.bf16.msra.mxu0 %v205
  %299 = vmatpush.bf16.msra.mxu0 %v203
  %300 = vmatmul.bf16.gmra.mxu0 %v51
  %v301 = vpop.f32.mrf.mxu0
  %v302 = vadd.f32 %v288, %v301
  %v303 = vpop.f32.mrf.mxu0
  %v304 = vadd.f32 %v290, %v303
  %305 = vdwg.mxu0
  %306 = vst [vmem:[%s5] sm:$0xff] %v274
  %307 = vst [vmem:[%s5 + $0x8] sm:$0xff] %v302
  %308 = vst [vmem:[%s5 + $0x10] sm:$0xff] %v276
  %309 = vst [vmem:[%s5 + $0x18] sm:$0xff] %v304
  // Predicated region
  $region22: #{local_attention.5} parent=0 // pred_check
    _
  $region23: #{local_attention.5} parent=0 // pred_check_branch
    %311 = sbr.rel (0) target = $region25
  $region24: #{local_attention.5} parent=0 // pred_region
    _
  $region25: #{local_attention.5} parent=0 // pred_fallthru
    _
  // Predicated region
  $region26: #{local_attention.5} parent=0 // pred_check
    _
  $region27: #{local_attention.5} parent=0 // pred_check_branch
    %313 = sbr.rel (0) target = $region29
  $region28: #{local_attention.5} parent=0 // pred_region
    _
  $region29: #{local_attention.5} parent=0 // pred_fallthru
    _

</llo_original>
